<compile_context>
chip_gen: v7x
topology: tpu7x:2x2x1
jax: 0.10.0
libtpu: 0.0.40
codegen_flags: <defaults>
</compile_context>

<pallas_src>
import functools

import numpy as np
import jax
import jax.numpy as jnp
from jax.experimental import pallas as pl
from jax.experimental.pallas import tpu as pltpu

DILATIONS = (6, 12, 18, 24)
N_TAPS = len(DILATIONS) * 9          # 36


def _round_up(x, m):
    return (x + m - 1) // m * m


def _vmem_limit_bytes():
    """Generation-aware VMEM limit (conservative 64 MiB assumption if query fails)."""
    cap = 64 * 1024 * 1024
    try:
        info = pltpu.get_tpu_info()
        cap = int(getattr(info, "vmem_capacity_bytes", cap))
    except Exception:
        pass
    return max(32 * 1024 * 1024, min(cap - 16 * 1024 * 1024, 100 * 1024 * 1024))


def _pick_k_chunk(cin_pad, hw_pad, cout_pad, vmem_limit):
    """Largest CIN-reduction chunk whose rough VMEM footprint fits the budget."""
    n_rows = N_TAPS * cout_pad

    def est(kc):
        return (2 * kc * hw_pad * 4                 # image block, double-buffered (f32)
                + 2 * 2 * n_rows * kc * 2           # two bf16 weight operands, 2-buf
                + 2 * cout_pad * hw_pad * 4         # resident output block
                + 2 * 2 * hw_pad * 4                # coords
                + kc * hw_pad * 8                   # in-kernel x hi/lo split temps
                + (9 + 6) * cout_pad * hw_pad * 4)  # z_d transient + dilation partials

    if cin_pad <= 512:
        cands = [cin_pad]
    else:
        cands = [c for c in (512, 256, 128) if cin_pad % c == 0]
    budget = int(vmem_limit * 0.6)
    for c in cands:
        if est(c) <= budget:
            return c, cin_pad // c
    # TODO(synk): spatial tiling would bound this instead of falling through.
    c = cands[-1]
    return c, cin_pad // c


def _build_tap_specs(H, W):
    """Static (shift, y0, y1, x0, x1, nonzero) per (dilation, ky, kx) tap."""
    specs = []
    for d in DILATIONS:
        for ky in range(3):
            for kx in range(3):
                dy, dx = (ky - 1) * d, (kx - 1) * d
                specs.append((dy * W + dx,                       # flat-index shift
                              -dy, H - dy,                       # valid y range
                              -dx, W - dx,                       # valid x range
                              (abs(dy) < H) and (abs(dx) < W)))  # any valid pixel?
    return tuple(specs)


def _aspp_kernel(x_ref, wh_ref, wl_ref, c_ref, b_ref, o_ref, *,
                 cout_pad, hw_pad, tap_specs):
    # x_ref : (1, k_chunk, HW_pad) f32       image chunk, channels-first, flat spatial
    # wh/wl : (4, 9*cout_pad, k_chunk) bf16  hi/lo weight halves, taps stacked on M
    # c_ref : (2, HW_pad) int32              row 0 = y coords, row 1 = x coords
    # b_ref : (cout_pad, 1) f32              summed branch biases
    # o_ref : (1, cout_pad, HW_pad)          accumulated in place across the k axis
    k = pl.program_id(1)

    x = x_ref[0]                                       # (k_chunk, HW_pad) f32
    x_hi = x.astype(jnp.bfloat16)
    x_lo = (x - x_hi.astype(jnp.float32)).astype(jnp.bfloat16)

    yc = c_ref[0:1, :]                                 # (1, HW_pad) int32
    xc = c_ref[1:2, :]

    dil_partials = []
    for d in range(len(DILATIONS)):
        w_hi = wh_ref[d]                               # (9*cout_pad, k_chunk) bf16
        w_lo = wl_ref[d]
        # bf16_3x: three bf16 MXU passes, f32 accumulate (lo*lo term dropped).
        z_d = (jnp.dot(w_hi, x_hi, preferred_element_type=jnp.float32) +
               jnp.dot(w_hi, x_lo, preferred_element_type=jnp.float32) +
               jnp.dot(w_lo, x_hi, preferred_element_type=jnp.float32))

        p_d = None
        for t in range(9):
            shift, y0, y1, x0, x1, nonzero = tap_specs[d * 9 + t]
            if not nonzero:                            # tap never lands in the image
                continue
            z_t = z_d[t * cout_pad:(t + 1) * cout_pad, :]
            if shift % hw_pad != 0:
                # out[p] needs z_t[p + shift]; roll gives z_t[(p - s) % HW_pad].
                z_t = pltpu.roll(z_t, shift=(-shift) % hw_pad, axis=1)   # XLU rotate
            mask = ((yc >= y0) & (yc < y1) &
                    (xc >= x0) & (xc < x1)).astype(jnp.float32)
            z_t = z_t * mask                           # VPU lane mask (sublane bcast)
            p_d = z_t if p_d is None else p_d + z_t
        if p_d is not None:
            dil_partials.append(p_d)

    # Pairwise tree-sum: 4 short independent chains instead of one 36-step chain.
    while len(dil_partials) > 1:
        nxt = [dil_partials[i] + dil_partials[i + 1]
               for i in range(0, len(dil_partials) - 1, 2)]
        if len(dil_partials) % 2:
            nxt.append(dil_partials[-1])
        dil_partials = nxt
    partial = dil_partials[0]

    @pl.when(k == 0)
    def _():                                           # bias folded into first write
        o_ref[0] = (partial + b_ref[...]).astype(o_ref.dtype)

    @pl.when(k > 0)
    def _():
        o_ref[0] = o_ref[0] + partial.astype(o_ref.dtype)


def aspp_v2_pallas(x_nchw, w_hi, w_lo, bias_col, num_classes):
    """x_nchw: (N, CIN, H, W) f32.  w_hi/w_lo: (4, 9*COUT_pad, CIN_pad) bf16."""
    N, CIN, H, W = x_nchw.shape
    HW = H * W
    hw_pad = _round_up(HW, 128)
    cout_pad = bias_col.shape[0]
    cin_pad = w_hi.shape[-1]
    n_grp = 9 * cout_pad

    vmem_limit = _vmem_limit_bytes()
    k_chunk, num_k = _pick_k_chunk(cin_pad, hw_pad, cout_pad, vmem_limit)

    # Channels-first, flat lane-dense spatial; zero-pad CIN / lanes host-side.
    x2 = x_nchw.reshape(N, CIN, HW)                    # contiguous -> free reshape
    if cin_pad != CIN or hw_pad != HW:
        x2 = jnp.pad(x2, ((0, 0), (0, cin_pad - CIN), (0, hw_pad - HW)))

    # Tiny coordinate table for in-kernel boundary masks (pad lanes fail all masks).
    ys, xs = np.divmod(np.arange(HW, dtype=np.int64), W)
    coords_np = np.full((2, hw_pad), -(1 << 20), dtype=np.int32)
    coords_np[0, :HW] = ys
    coords_np[1, :HW] = xs
    coords = jnp.asarray(coords_np)

    kernel = functools.partial(_aspp_kernel, cout_pad=cout_pad, hw_pad=hw_pad,
                               tap_specs=_build_tap_specs(H, W))

    out = pl.pallas_call(
        kernel,
        out_shape=jax.ShapeDtypeStruct((N, cout_pad, hw_pad), x_nchw.dtype),
        grid_spec=pltpu.PrefetchScalarGridSpec(
            num_scalar_prefetch=0,
            grid=(N, num_k),
            in_specs=[
                pl.BlockSpec((1, k_chunk, hw_pad), lambda n, k: (n, k, 0)),      # image
                pl.BlockSpec((len(DILATIONS), n_grp, k_chunk),
                             lambda n, k: (0, 0, k)),                            # w_hi
                pl.BlockSpec((len(DILATIONS), n_grp, k_chunk),
                             lambda n, k: (0, 0, k)),                            # w_lo
                pl.BlockSpec((2, hw_pad), lambda n, k: (0, 0)),                  # coords
                pl.BlockSpec((cout_pad, 1), lambda n, k: (0, 0)),                # bias
            ],
            out_specs=pl.BlockSpec((1, cout_pad, hw_pad), lambda n, k: (n, 0, 0)),
        ),
        compiler_params=pltpu.CompilerParams(
            dimension_semantics=("parallel", "arbitrary"),
            vmem_limit_bytes=vmem_limit,
        ),
    )(x2, w_hi, w_lo, coords, bias_col)

    return out[:, :num_classes, :HW].reshape(N, num_classes, H, W)


class DeeplabV2DecoderPallas:
    """Deterministically-initialized DeeplabV2Decoder (ASPP_V2 head), Pallas forward."""

    def __init__(self, input_channels, num_classes, key):
        cin = input_channels[-1]
        self.cin = cin
        self.cout = num_classes
        self.out_channels = [num_classes]
        kw, kb = jax.random.split(key)
        # PyTorch init: weight ~ N(0, 0.01); bias ~ default Conv2d uniform.
        # Raw storage (n_branch, 3, 3, Cin, Cout) -- used by the JAX reference.
        self.weights = 0.01 * jax.random.normal(
            kw, (len(DILATIONS), 3, 3, cin, num_classes), dtype=jnp.float32)
        bound = 1.0 / float(np.sqrt(cin * 3 * 3))
        self.biases = jax.random.uniform(
            kb, (len(DILATIONS), num_classes), dtype=jnp.float32,
            minval=-bound, maxval=bound)

        # Kernel-friendly layouts (built once, at init):
        #   w_hi/w_lo : (4, 9*COUT_pad, CIN_pad) bf16  hi/lo split for bf16_3x matmul
        #   bias_col  : (COUT_pad, 1) f32              sum of the 4 branch biases
        cout_pad = _round_up(num_classes, 8)
        cin_pad = _round_up(cin, 8) if cin <= 512 else _round_up(cin, 128)
        self.cout_pad, self.cin_pad = cout_pad, cin_pad

        w_oc = jnp.swapaxes(self.weights, 3, 4)                   # (4,3,3,Cout,Cin)
        w_oc = jnp.pad(w_oc, ((0, 0), (0, 0), (0, 0),
                              (0, cout_pad - num_classes), (0, cin_pad - cin)))
        w_all = w_oc.reshape(len(DILATIONS), 9 * cout_pad, cin_pad)
        w_hi = w_all.astype(jnp.bfloat16)
        w_lo = (w_all - w_hi.astype(jnp.float32)).astype(jnp.bfloat16)
        self.w_hi, self.w_lo = w_hi, w_lo

        bsum = jnp.sum(self.biases, axis=0)                       # (Cout,)
        bsum = jnp.pad(bsum, (0, cout_pad - num_classes))
        self.bias_col = bsum.reshape(cout_pad, 1)

    def __call__(self, features):
        if len(features) != 5:
            raise ValueError(
                'Expected 5 features, got {} features instead.'.format(len(features)))
        x = features[-1]                                          # (N, Cin, H, W)
        return aspp_v2_pallas(x, self.w_hi, self.w_lo, self.bias_col, self.cout)


def _reference(x_nchw, weights, biases):
    """Pure-JAX reference using lax.conv_general_dilated (NCHW, OIHW)."""
    out = None
    for i, d in enumerate(DILATIONS):
        w = jnp.transpose(weights[i], (3, 2, 0, 1))               # -> (Cout, Cin, 3, 3)
        y = jax.lax.conv_general_dilated(
            x_nchw, w, window_strides=(1, 1),
            padding=((d, d), (d, d)), rhs_dilation=(d, d),
            dimension_numbers=('NCHW', 'OIHW', 'NCHW'))
        y = y + biases[i][None, :, None, None]
        out = y if out is None else out + y
    return out


if __name__ == "__main__":
    key = jax.random.PRNGKey(0)
    k_feat, k_params = jax.random.split(key)

    # Small, module-consistent shapes: 5 features, only the last is used.
    N, H, W = 2, 16, 16
    input_channels = [4, 4, 8, 8, 8]     # Cin = input_channels[-1] = 8
    num_classes = 6

    feat_keys = jax.random.split(k_feat, 5)
    features = [
        jax.random.normal(feat_keys[i], (N, c, H, W), dtype=jnp.float32)
        for i, c in enumerate(input_channels)
    ]

    decoder = DeeplabV2DecoderPallas(input_channels, num_classes, k_params)

    out = decoder(features)
    out = jax.block_until_ready(out)

    ref = _reference(features[-1], decoder.weights, decoder.biases)
    ref = jax.block_until_ready(ref)

    assert out.shape == (N, num_classes, H, W), out.shape
    if not jnp.allclose(out, ref, atol=1e-4, rtol=1e-4):
        raise AssertionError("Pallas ASPP output mismatch vs JAX reference")

    print("KERNEL_OK")
</pallas_src>

<mosaic_0001>
module attributes {stable_mosaic.version = 11 : i64} {
  func.func @_aspp_kernel(%arg0: i32, %arg1: i32, %arg2: memref<1x8x256xf32, #tpu.memory_space<vmem>>, %arg3: memref<4x72x8xbf16, #tpu.memory_space<vmem>>, %arg4: memref<4x72x8xbf16, #tpu.memory_space<vmem>>, %arg5: memref<2x256xi32, #tpu.memory_space<vmem>>, %arg6: memref<8x1xf32, #tpu.memory_space<vmem>>, %arg7: memref<1x8x256xf32, #tpu.memory_space<vmem>>) attributes {dimension_semantics = [#tpu.dimension_semantics<parallel>, #tpu.dimension_semantics<arbitrary>], iteration_bounds = array<i64: 2, 1>, scalar_prefetch = 0 : i64, scratch_operands = 0 : i64, tpu.core_type = #tpu.core_type<tc>, window_params = [{transform_indices = @transform_0, window_bounds = array<i64: 1, 8, 256>}, {transform_indices = @transform_1, window_bounds = array<i64: 4, 72, 8>}, {transform_indices = @transform_2, window_bounds = array<i64: 4, 72, 8>}, {pipeline_mode = #tpu.pipeline_mode<synchronous>, transform_indices = @transform_3, window_bounds = array<i64: 2, 256>}, {pipeline_mode = #tpu.pipeline_mode<synchronous>, transform_indices = @transform_4, window_bounds = array<i64: 8, 1>}, {transform_indices = @transform_5, window_bounds = array<i64: 1, 8, 256>}]} {
    %c0 = arith.constant 0 : index
    %c0_0 = arith.constant 0 : index
    %c0_1 = arith.constant 0 : index
    %0 = vector.load %arg2[%c0, %c0_0, %c0_1] : memref<1x8x256xf32, #tpu.memory_space<vmem>>, vector<1x8x256xf32>
    %1 = vector.shape_cast %0 : vector<1x8x256xf32> to vector<8x256xf32>
    %2 = arith.truncf %1 : vector<8x256xf32> to vector<8x256xbf16>
    %3 = arith.extf %2 : vector<8x256xbf16> to vector<8x256xf32>
    %4 = arith.subf %1, %3 : vector<8x256xf32>
    %5 = arith.truncf %4 : vector<8x256xf32> to vector<8x256xbf16>
    %c0_2 = arith.constant 0 : index
    %c0_3 = arith.constant 0 : index
    %6 = vector.load %arg5[%c0_2, %c0_3] : memref<2x256xi32, #tpu.memory_space<vmem>>, vector<1x256xi32>
    %c1 = arith.constant 1 : index
    %c0_4 = arith.constant 0 : index
    %7 = vector.load %arg5[%c1, %c0_4] : memref<2x256xi32, #tpu.memory_space<vmem>>, vector<1x256xi32>
    %c0_5 = arith.constant 0 : index
    %c0_6 = arith.constant 0 : index
    %c0_7 = arith.constant 0 : index
    %8 = vector.load %arg3[%c0_5, %c0_6, %c0_7] : memref<4x72x8xbf16, #tpu.memory_space<vmem>>, vector<1x72x8xbf16>
    %9 = vector.shape_cast %8 : vector<1x72x8xbf16> to vector<72x8xbf16>
    %c0_8 = arith.constant 0 : index
    %c0_9 = arith.constant 0 : index
    %c0_10 = arith.constant 0 : index
    %10 = vector.load %arg4[%c0_8, %c0_9, %c0_10] : memref<4x72x8xbf16, #tpu.memory_space<vmem>>, vector<1x72x8xbf16>
    %11 = vector.shape_cast %10 : vector<1x72x8xbf16> to vector<72x8xbf16>
    %cst = arith.constant dense<0.000000e+00> : vector<72x256xf32>
    %12 = tpu.matmul %9, %2, %cst {dimension_numbers = #tpu.dot_dimension_numbers<[1], [0], [0], [1], [0, 0, 1, 1], [], []>} : vector<72x8xbf16>, vector<8x256xbf16>, vector<72x256xf32> -> vector<72x256xf32>
    %cst_11 = arith.constant dense<0.000000e+00> : vector<72x256xf32>
    %13 = tpu.matmul %9, %5, %cst_11 {dimension_numbers = #tpu.dot_dimension_numbers<[1], [0], [0], [1], [0, 0, 1, 1], [], []>} : vector<72x8xbf16>, vector<8x256xbf16>, vector<72x256xf32> -> vector<72x256xf32>
    %14 = arith.addf %12, %13 : vector<72x256xf32>
    %cst_12 = arith.constant dense<0.000000e+00> : vector<72x256xf32>
    %15 = tpu.matmul %11, %2, %cst_12 {dimension_numbers = #tpu.dot_dimension_numbers<[1], [0], [0], [1], [0, 0, 1, 1], [], []>} : vector<72x8xbf16>, vector<8x256xbf16>, vector<72x256xf32> -> vector<72x256xf32>
    %16 = arith.addf %14, %15 : vector<72x256xf32>
    %17 = vector.extract_strided_slice %16 {offsets = [0, 0], sizes = [8, 256], strides = [1, 1]} : vector<72x256xf32> to vector<8x256xf32>
    %c102_i32 = arith.constant 102 : i32
    %18 = tpu.dynamic_rotate %17 by %c102_i32 dim 1 : vector<8x256xf32>, i32 -> vector<8x256xf32>
    %c6_i32 = arith.constant 6 : i32
    %19 = vector.broadcast %c6_i32 : i32 to vector<1x256xi32>
    %20 = arith.cmpi sge, %6, %19 : vector<1x256xi32>
    %c22_i32 = arith.constant 22 : i32
    %21 = vector.broadcast %c22_i32 : i32 to vector<1x256xi32>
    %22 = arith.cmpi slt, %6, %21 : vector<1x256xi32>
    %23 = arith.andi %20, %22 : vector<1x256xi1>
    %c6_i32_13 = arith.constant 6 : i32
    %24 = vector.broadcast %c6_i32_13 : i32 to vector<1x256xi32>
    %25 = arith.cmpi sge, %7, %24 : vector<1x256xi32>
    %26 = arith.andi %23, %25 : vector<1x256xi1>
    %c22_i32_14 = arith.constant 22 : i32
    %27 = vector.broadcast %c22_i32_14 : i32 to vector<1x256xi32>
    %28 = arith.cmpi slt, %7, %27 : vector<1x256xi32>
    %29 = arith.andi %26, %28 : vector<1x256xi1>
    %30 = arith.extui %29 : vector<1x256xi1> to vector<1x256xi32>
    %31 = arith.sitofp %30 : vector<1x256xi32> to vector<1x256xf32>
    %32 = vector.broadcast %31 : vector<1x256xf32> to vector<8x256xf32>
    %33 = arith.mulf %18, %32 : vector<8x256xf32>
    %34 = vector.extract_strided_slice %16 {offsets = [8, 0], sizes = [8, 256], strides = [1, 1]} : vector<72x256xf32> to vector<8x256xf32>
    %c96_i32 = arith.constant 96 : i32
    %35 = tpu.dynamic_rotate %34 by %c96_i32 dim 1 : vector<8x256xf32>, i32 -> vector<8x256xf32>
    %c6_i32_15 = arith.constant 6 : i32
    %36 = vector.broadcast %c6_i32_15 : i32 to vector<1x256xi32>
    %37 = arith.cmpi sge, %6, %36 : vector<1x256xi32>
    %c22_i32_16 = arith.constant 22 : i32
    %38 = vector.broadcast %c22_i32_16 : i32 to vector<1x256xi32>
    %39 = arith.cmpi slt, %6, %38 : vector<1x256xi32>
    %40 = arith.andi %37, %39 : vector<1x256xi1>
    %c0_i32 = arith.constant 0 : i32
    %41 = vector.broadcast %c0_i32 : i32 to vector<1x256xi32>
    %42 = arith.cmpi sge, %7, %41 : vector<1x256xi32>
    %43 = arith.andi %40, %42 : vector<1x256xi1>
    %c16_i32 = arith.constant 16 : i32
    %44 = vector.broadcast %c16_i32 : i32 to vector<1x256xi32>
    %45 = arith.cmpi slt, %7, %44 : vector<1x256xi32>
    %46 = arith.andi %43, %45 : vector<1x256xi1>
    %47 = arith.extui %46 : vector<1x256xi1> to vector<1x256xi32>
    %48 = arith.sitofp %47 : vector<1x256xi32> to vector<1x256xf32>
    %49 = vector.broadcast %48 : vector<1x256xf32> to vector<8x256xf32>
    %50 = arith.mulf %35, %49 : vector<8x256xf32>
    %51 = arith.addf %33, %50 : vector<8x256xf32>
    %52 = vector.extract_strided_slice %16 {offsets = [16, 0], sizes = [8, 256], strides = [1, 1]} : vector<72x256xf32> to vector<8x256xf32>
    %c90_i32 = arith.constant 90 : i32
    %53 = tpu.dynamic_rotate %52 by %c90_i32 dim 1 : vector<8x256xf32>, i32 -> vector<8x256xf32>
    %c6_i32_17 = arith.constant 6 : i32
    %54 = vector.broadcast %c6_i32_17 : i32 to vector<1x256xi32>
    %55 = arith.cmpi sge, %6, %54 : vector<1x256xi32>
    %c22_i32_18 = arith.constant 22 : i32
    %56 = vector.broadcast %c22_i32_18 : i32 to vector<1x256xi32>
    %57 = arith.cmpi slt, %6, %56 : vector<1x256xi32>
    %58 = arith.andi %55, %57 : vector<1x256xi1>
    %c-6_i32 = arith.constant -6 : i32
    %59 = vector.broadcast %c-6_i32 : i32 to vector<1x256xi32>
    %60 = arith.cmpi sge, %7, %59 : vector<1x256xi32>
    %61 = arith.andi %58, %60 : vector<1x256xi1>
    %c10_i32 = arith.constant 10 : i32
    %62 = vector.broadcast %c10_i32 : i32 to vector<1x256xi32>
    %63 = arith.cmpi slt, %7, %62 : vector<1x256xi32>
    %64 = arith.andi %61, %63 : vector<1x256xi1>
    %65 = arith.extui %64 : vector<1x256xi1> to vector<1x256xi32>
    %66 = arith.sitofp %65 : vector<1x256xi32> to vector<1x256xf32>
    %67 = vector.broadcast %66 : vector<1x256xf32> to vector<8x256xf32>
    %68 = arith.mulf %53, %67 : vector<8x256xf32>
    %69 = arith.addf %51, %68 : vector<8x256xf32>
    %70 = vector.extract_strided_slice %16 {offsets = [24, 0], sizes = [8, 256], strides = [1, 1]} : vector<72x256xf32> to vector<8x256xf32>
    %c6_i32_19 = arith.constant 6 : i32
    %71 = tpu.dynamic_rotate %70 by %c6_i32_19 dim 1 : vector<8x256xf32>, i32 -> vector<8x256xf32>
    %c0_i32_20 = arith.constant 0 : i32
    %72 = vector.broadcast %c0_i32_20 : i32 to vector<1x256xi32>
    %73 = arith.cmpi sge, %6, %72 : vector<1x256xi32>
    %c16_i32_21 = arith.constant 16 : i32
    %74 = vector.broadcast %c16_i32_21 : i32 to vector<1x256xi32>
    %75 = arith.cmpi slt, %6, %74 : vector<1x256xi32>
    %76 = arith.andi %73, %75 : vector<1x256xi1>
    %c6_i32_22 = arith.constant 6 : i32
    %77 = vector.broadcast %c6_i32_22 : i32 to vector<1x256xi32>
    %78 = arith.cmpi sge, %7, %77 : vector<1x256xi32>
    %79 = arith.andi %76, %78 : vector<1x256xi1>
    %c22_i32_23 = arith.constant 22 : i32
    %80 = vector.broadcast %c22_i32_23 : i32 to vector<1x256xi32>
    %81 = arith.cmpi slt, %7, %80 : vector<1x256xi32>
    %82 = arith.andi %79, %81 : vector<1x256xi1>
    %83 = arith.extui %82 : vector<1x256xi1> to vector<1x256xi32>
    %84 = arith.sitofp %83 : vector<1x256xi32> to vector<1x256xf32>
    %85 = vector.broadcast %84 : vector<1x256xf32> to vector<8x256xf32>
    %86 = arith.mulf %71, %85 : vector<8x256xf32>
    %87 = arith.addf %69, %86 : vector<8x256xf32>
    %88 = vector.extract_strided_slice %16 {offsets = [32, 0], sizes = [8, 256], strides = [1, 1]} : vector<72x256xf32> to vector<8x256xf32>
    %c0_i32_24 = arith.constant 0 : i32
    %89 = vector.broadcast %c0_i32_24 : i32 to vector<1x256xi32>
    %90 = arith.cmpi sge, %6, %89 : vector<1x256xi32>
    %c16_i32_25 = arith.constant 16 : i32
    %91 = vector.broadcast %c16_i32_25 : i32 to vector<1x256xi32>
    %92 = arith.cmpi slt, %6, %91 : vector<1x256xi32>
    %93 = arith.andi %90, %92 : vector<1x256xi1>
    %c0_i32_26 = arith.constant 0 : i32
    %94 = vector.broadcast %c0_i32_26 : i32 to vector<1x256xi32>
    %95 = arith.cmpi sge, %7, %94 : vector<1x256xi32>
    %96 = arith.andi %93, %95 : vector<1x256xi1>
    %c16_i32_27 = arith.constant 16 : i32
    %97 = vector.broadcast %c16_i32_27 : i32 to vector<1x256xi32>
    %98 = arith.cmpi slt, %7, %97 : vector<1x256xi32>
    %99 = arith.andi %96, %98 : vector<1x256xi1>
    %100 = arith.extui %99 : vector<1x256xi1> to vector<1x256xi32>
    %101 = arith.sitofp %100 : vector<1x256xi32> to vector<1x256xf32>
    %102 = vector.broadcast %101 : vector<1x256xf32> to vector<8x256xf32>
    %103 = arith.mulf %88, %102 : vector<8x256xf32>
    %104 = arith.addf %87, %103 : vector<8x256xf32>
    %105 = vector.extract_strided_slice %16 {offsets = [40, 0], sizes = [8, 256], strides = [1, 1]} : vector<72x256xf32> to vector<8x256xf32>
    %c250_i32 = arith.constant 250 : i32
    %106 = tpu.dynamic_rotate %105 by %c250_i32 dim 1 : vector<8x256xf32>, i32 -> vector<8x256xf32>
    %c0_i32_28 = arith.constant 0 : i32
    %107 = vector.broadcast %c0_i32_28 : i32 to vector<1x256xi32>
    %108 = arith.cmpi sge, %6, %107 : vector<1x256xi32>
    %c16_i32_29 = arith.constant 16 : i32
    %109 = vector.broadcast %c16_i32_29 : i32 to vector<1x256xi32>
    %110 = arith.cmpi slt, %6, %109 : vector<1x256xi32>
    %111 = arith.andi %108, %110 : vector<1x256xi1>
    %c-6_i32_30 = arith.constant -6 : i32
    %112 = vector.broadcast %c-6_i32_30 : i32 to vector<1x256xi32>
    %113 = arith.cmpi sge, %7, %112 : vector<1x256xi32>
    %114 = arith.andi %111, %113 : vector<1x256xi1>
    %c10_i32_31 = arith.constant 10 : i32
    %115 = vector.broadcast %c10_i32_31 : i32 to vector<1x256xi32>
    %116 = arith.cmpi slt, %7, %115 : vector<1x256xi32>
    %117 = arith.andi %114, %116 : vector<1x256xi1>
    %118 = arith.extui %117 : vector<1x256xi1> to vector<1x256xi32>
    %119 = arith.sitofp %118 : vector<1x256xi32> to vector<1x256xf32>
    %120 = vector.broadcast %119 : vector<1x256xf32> to vector<8x256xf32>
    %121 = arith.mulf %106, %120 : vector<8x256xf32>
    %122 = arith.addf %104, %121 : vector<8x256xf32>
    %123 = vector.extract_strided_slice %16 {offsets = [48, 0], sizes = [8, 256], strides = [1, 1]} : vector<72x256xf32> to vector<8x256xf32>
    %c166_i32 = arith.constant 166 : i32
    %124 = tpu.dynamic_rotate %123 by %c166_i32 dim 1 : vector<8x256xf32>, i32 -> vector<8x256xf32>
    %c-6_i32_32 = arith.constant -6 : i32
    %125 = vector.broadcast %c-6_i32_32 : i32 to vector<1x256xi32>
    %126 = arith.cmpi sge, %6, %125 : vector<1x256xi32>
    %c10_i32_33 = arith.constant 10 : i32
    %127 = vector.broadcast %c10_i32_33 : i32 to vector<1x256xi32>
    %128 = arith.cmpi slt, %6, %127 : vector<1x256xi32>
    %129 = arith.andi %126, %128 : vector<1x256xi1>
    %c6_i32_34 = arith.constant 6 : i32
    %130 = vector.broadcast %c6_i32_34 : i32 to vector<1x256xi32>
    %131 = arith.cmpi sge, %7, %130 : vector<1x256xi32>
    %132 = arith.andi %129, %131 : vector<1x256xi1>
    %c22_i32_35 = arith.constant 22 : i32
    %133 = vector.broadcast %c22_i32_35 : i32 to vector<1x256xi32>
    %134 = arith.cmpi slt, %7, %133 : vector<1x256xi32>
    %135 = arith.andi %132, %134 : vector<1x256xi1>
    %136 = arith.extui %135 : vector<1x256xi1> to vector<1x256xi32>
    %137 = arith.sitofp %136 : vector<1x256xi32> to vector<1x256xf32>
    %138 = vector.broadcast %137 : vector<1x256xf32> to vector<8x256xf32>
    %139 = arith.mulf %124, %138 : vector<8x256xf32>
    %140 = arith.addf %122, %139 : vector<8x256xf32>
    %141 = vector.extract_strided_slice %16 {offsets = [56, 0], sizes = [8, 256], strides = [1, 1]} : vector<72x256xf32> to vector<8x256xf32>
    %c160_i32 = arith.constant 160 : i32
    %142 = tpu.dynamic_rotate %141 by %c160_i32 dim 1 : vector<8x256xf32>, i32 -> vector<8x256xf32>
    %c-6_i32_36 = arith.constant -6 : i32
    %143 = vector.broadcast %c-6_i32_36 : i32 to vector<1x256xi32>
    %144 = arith.cmpi sge, %6, %143 : vector<1x256xi32>
    %c10_i32_37 = arith.constant 10 : i32
    %145 = vector.broadcast %c10_i32_37 : i32 to vector<1x256xi32>
    %146 = arith.cmpi slt, %6, %145 : vector<1x256xi32>
    %147 = arith.andi %144, %146 : vector<1x256xi1>
    %c0_i32_38 = arith.constant 0 : i32
    %148 = vector.broadcast %c0_i32_38 : i32 to vector<1x256xi32>
    %149 = arith.cmpi sge, %7, %148 : vector<1x256xi32>
    %150 = arith.andi %147, %149 : vector<1x256xi1>
    %c16_i32_39 = arith.constant 16 : i32
    %151 = vector.broadcast %c16_i32_39 : i32 to vector<1x256xi32>
    %152 = arith.cmpi slt, %7, %151 : vector<1x256xi32>
    %153 = arith.andi %150, %152 : vector<1x256xi1>
    %154 = arith.extui %153 : vector<1x256xi1> to vector<1x256xi32>
    %155 = arith.sitofp %154 : vector<1x256xi32> to vector<1x256xf32>
    %156 = vector.broadcast %155 : vector<1x256xf32> to vector<8x256xf32>
    %157 = arith.mulf %142, %156 : vector<8x256xf32>
    %158 = arith.addf %140, %157 : vector<8x256xf32>
    %159 = vector.extract_strided_slice %16 {offsets = [64, 0], sizes = [8, 256], strides = [1, 1]} : vector<72x256xf32> to vector<8x256xf32>
    %c154_i32 = arith.constant 154 : i32
    %160 = tpu.dynamic_rotate %159 by %c154_i32 dim 1 : vector<8x256xf32>, i32 -> vector<8x256xf32>
    %c-6_i32_40 = arith.constant -6 : i32
    %161 = vector.broadcast %c-6_i32_40 : i32 to vector<1x256xi32>
    %162 = arith.cmpi sge, %6, %161 : vector<1x256xi32>
    %c10_i32_41 = arith.constant 10 : i32
    %163 = vector.broadcast %c10_i32_41 : i32 to vector<1x256xi32>
    %164 = arith.cmpi slt, %6, %163 : vector<1x256xi32>
    %165 = arith.andi %162, %164 : vector<1x256xi1>
    %c-6_i32_42 = arith.constant -6 : i32
    %166 = vector.broadcast %c-6_i32_42 : i32 to vector<1x256xi32>
    %167 = arith.cmpi sge, %7, %166 : vector<1x256xi32>
    %168 = arith.andi %165, %167 : vector<1x256xi1>
    %c10_i32_43 = arith.constant 10 : i32
    %169 = vector.broadcast %c10_i32_43 : i32 to vector<1x256xi32>
    %170 = arith.cmpi slt, %7, %169 : vector<1x256xi32>
    %171 = arith.andi %168, %170 : vector<1x256xi1>
    %172 = arith.extui %171 : vector<1x256xi1> to vector<1x256xi32>
    %173 = arith.sitofp %172 : vector<1x256xi32> to vector<1x256xf32>
    %174 = vector.broadcast %173 : vector<1x256xf32> to vector<8x256xf32>
    %175 = arith.mulf %160, %174 : vector<8x256xf32>
    %176 = arith.addf %158, %175 : vector<8x256xf32>
    %c1_44 = arith.constant 1 : index
    %c0_45 = arith.constant 0 : index
    %c0_46 = arith.constant 0 : index
    %177 = vector.load %arg3[%c1_44, %c0_45, %c0_46] : memref<4x72x8xbf16, #tpu.memory_space<vmem>>, vector<1x72x8xbf16>
    %178 = vector.shape_cast %177 : vector<1x72x8xbf16> to vector<72x8xbf16>
    %c1_47 = arith.constant 1 : index
    %c0_48 = arith.constant 0 : index
    %c0_49 = arith.constant 0 : index
    %179 = vector.load %arg4[%c1_47, %c0_48, %c0_49] : memref<4x72x8xbf16, #tpu.memory_space<vmem>>, vector<1x72x8xbf16>
    %180 = vector.shape_cast %179 : vector<1x72x8xbf16> to vector<72x8xbf16>
    %cst_50 = arith.constant dense<0.000000e+00> : vector<72x256xf32>
    %181 = tpu.matmul %178, %2, %cst_50 {dimension_numbers = #tpu.dot_dimension_numbers<[1], [0], [0], [1], [0, 0, 1, 1], [], []>} : vector<72x8xbf16>, vector<8x256xbf16>, vector<72x256xf32> -> vector<72x256xf32>
    %cst_51 = arith.constant dense<0.000000e+00> : vector<72x256xf32>
    %182 = tpu.matmul %178, %5, %cst_51 {dimension_numbers = #tpu.dot_dimension_numbers<[1], [0], [0], [1], [0, 0, 1, 1], [], []>} : vector<72x8xbf16>, vector<8x256xbf16>, vector<72x256xf32> -> vector<72x256xf32>
    %183 = arith.addf %181, %182 : vector<72x256xf32>
    %cst_52 = arith.constant dense<0.000000e+00> : vector<72x256xf32>
    %184 = tpu.matmul %180, %2, %cst_52 {dimension_numbers = #tpu.dot_dimension_numbers<[1], [0], [0], [1], [0, 0, 1, 1], [], []>} : vector<72x8xbf16>, vector<8x256xbf16>, vector<72x256xf32> -> vector<72x256xf32>
    %185 = arith.addf %183, %184 : vector<72x256xf32>
    %186 = vector.extract_strided_slice %185 {offsets = [0, 0], sizes = [8, 256], strides = [1, 1]} : vector<72x256xf32> to vector<8x256xf32>
    %c204_i32 = arith.constant 204 : i32
    %187 = tpu.dynamic_rotate %186 by %c204_i32 dim 1 : vector<8x256xf32>, i32 -> vector<8x256xf32>
    %c12_i32 = arith.constant 12 : i32
    %188 = vector.broadcast %c12_i32 : i32 to vector<1x256xi32>
    %189 = arith.cmpi sge, %6, %188 : vector<1x256xi32>
    %c28_i32 = arith.constant 28 : i32
    %190 = vector.broadcast %c28_i32 : i32 to vector<1x256xi32>
    %191 = arith.cmpi slt, %6, %190 : vector<1x256xi32>
    %192 = arith.andi %189, %191 : vector<1x256xi1>
    %c12_i32_53 = arith.constant 12 : i32
    %193 = vector.broadcast %c12_i32_53 : i32 to vector<1x256xi32>
    %194 = arith.cmpi sge, %7, %193 : vector<1x256xi32>
    %195 = arith.andi %192, %194 : vector<1x256xi1>
    %c28_i32_54 = arith.constant 28 : i32
    %196 = vector.broadcast %c28_i32_54 : i32 to vector<1x256xi32>
    %197 = arith.cmpi slt, %7, %196 : vector<1x256xi32>
    %198 = arith.andi %195, %197 : vector<1x256xi1>
    %199 = arith.extui %198 : vector<1x256xi1> to vector<1x256xi32>
    %200 = arith.sitofp %199 : vector<1x256xi32> to vector<1x256xf32>
    %201 = vector.broadcast %200 : vector<1x256xf32> to vector<8x256xf32>
    %202 = arith.mulf %187, %201 : vector<8x256xf32>
    %203 = vector.extract_strided_slice %185 {offsets = [8, 0], sizes = [8, 256], strides = [1, 1]} : vector<72x256xf32> to vector<8x256xf32>
    %c192_i32 = arith.constant 192 : i32
    %204 = tpu.dynamic_rotate %203 by %c192_i32 dim 1 : vector<8x256xf32>, i32 -> vector<8x256xf32>
    %c12_i32_55 = arith.constant 12 : i32
    %205 = vector.broadcast %c12_i32_55 : i32 to vector<1x256xi32>
    %206 = arith.cmpi sge, %6, %205 : vector<1x256xi32>
    %c28_i32_56 = arith.constant 28 : i32
    %207 = vector.broadcast %c28_i32_56 : i32 to vector<1x256xi32>
    %208 = arith.cmpi slt, %6, %207 : vector<1x256xi32>
    %209 = arith.andi %206, %208 : vector<1x256xi1>
    %c0_i32_57 = arith.constant 0 : i32
    %210 = vector.broadcast %c0_i32_57 : i32 to vector<1x256xi32>
    %211 = arith.cmpi sge, %7, %210 : vector<1x256xi32>
    %212 = arith.andi %209, %211 : vector<1x256xi1>
    %c16_i32_58 = arith.constant 16 : i32
    %213 = vector.broadcast %c16_i32_58 : i32 to vector<1x256xi32>
    %214 = arith.cmpi slt, %7, %213 : vector<1x256xi32>
    %215 = arith.andi %212, %214 : vector<1x256xi1>
    %216 = arith.extui %215 : vector<1x256xi1> to vector<1x256xi32>
    %217 = arith.sitofp %216 : vector<1x256xi32> to vector<1x256xf32>
    %218 = vector.broadcast %217 : vector<1x256xf32> to vector<8x256xf32>
    %219 = arith.mulf %204, %218 : vector<8x256xf32>
    %220 = arith.addf %202, %219 : vector<8x256xf32>
    %221 = vector.extract_strided_slice %185 {offsets = [16, 0], sizes = [8, 256], strides = [1, 1]} : vector<72x256xf32> to vector<8x256xf32>
    %c180_i32 = arith.constant 180 : i32
    %222 = tpu.dynamic_rotate %221 by %c180_i32 dim 1 : vector<8x256xf32>, i32 -> vector<8x256xf32>
    %c12_i32_59 = arith.constant 12 : i32
    %223 = vector.broadcast %c12_i32_59 : i32 to vector<1x256xi32>
    %224 = arith.cmpi sge, %6, %223 : vector<1x256xi32>
    %c28_i32_60 = arith.constant 28 : i32
    %225 = vector.broadcast %c28_i32_60 : i32 to vector<1x256xi32>
    %226 = arith.cmpi slt, %6, %225 : vector<1x256xi32>
    %227 = arith.andi %224, %226 : vector<1x256xi1>
    %c-12_i32 = arith.constant -12 : i32
    %228 = vector.broadcast %c-12_i32 : i32 to vector<1x256xi32>
    %229 = arith.cmpi sge, %7, %228 : vector<1x256xi32>
    %230 = arith.andi %227, %229 : vector<1x256xi1>
    %c4_i32 = arith.constant 4 : i32
    %231 = vector.broadcast %c4_i32 : i32 to vector<1x256xi32>
    %232 = arith.cmpi slt, %7, %231 : vector<1x256xi32>
    %233 = arith.andi %230, %232 : vector<1x256xi1>
    %234 = arith.extui %233 : vector<1x256xi1> to vector<1x256xi32>
    %235 = arith.sitofp %234 : vector<1x256xi32> to vector<1x256xf32>
    %236 = vector.broadcast %235 : vector<1x256xf32> to vector<8x256xf32>
    %237 = arith.mulf %222, %236 : vector<8x256xf32>
    %238 = arith.addf %220, %237 : vector<8x256xf32>
    %239 = vector.extract_strided_slice %185 {offsets = [24, 0], sizes = [8, 256], strides = [1, 1]} : vector<72x256xf32> to vector<8x256xf32>
    %c12_i32_61 = arith.constant 12 : i32
    %240 = tpu.dynamic_rotate %239 by %c12_i32_61 dim 1 : vector<8x256xf32>, i32 -> vector<8x256xf32>
    %c0_i32_62 = arith.constant 0 : i32
    %241 = vector.broadcast %c0_i32_62 : i32 to vector<1x256xi32>
    %242 = arith.cmpi sge, %6, %241 : vector<1x256xi32>
    %c16_i32_63 = arith.constant 16 : i32
    %243 = vector.broadcast %c16_i32_63 : i32 to vector<1x256xi32>
    %244 = arith.cmpi slt, %6, %243 : vector<1x256xi32>
    %245 = arith.andi %242, %244 : vector<1x256xi1>
    %c12_i32_64 = arith.constant 12 : i32
    %246 = vector.broadcast %c12_i32_64 : i32 to vector<1x256xi32>
    %247 = arith.cmpi sge, %7, %246 : vector<1x256xi32>
    %248 = arith.andi %245, %247 : vector<1x256xi1>
    %c28_i32_65 = arith.constant 28 : i32
    %249 = vector.broadcast %c28_i32_65 : i32 to vector<1x256xi32>
    %250 = arith.cmpi slt, %7, %249 : vector<1x256xi32>
    %251 = arith.andi %248, %250 : vector<1x256xi1>
    %252 = arith.extui %251 : vector<1x256xi1> to vector<1x256xi32>
    %253 = arith.sitofp %252 : vector<1x256xi32> to vector<1x256xf32>
    %254 = vector.broadcast %253 : vector<1x256xf32> to vector<8x256xf32>
    %255 = arith.mulf %240, %254 : vector<8x256xf32>
    %256 = arith.addf %238, %255 : vector<8x256xf32>
    %257 = vector.extract_strided_slice %185 {offsets = [32, 0], sizes = [8, 256], strides = [1, 1]} : vector<72x256xf32> to vector<8x256xf32>
    %c0_i32_66 = arith.constant 0 : i32
    %258 = vector.broadcast %c0_i32_66 : i32 to vector<1x256xi32>
    %259 = arith.cmpi sge, %6, %258 : vector<1x256xi32>
    %c16_i32_67 = arith.constant 16 : i32
    %260 = vector.broadcast %c16_i32_67 : i32 to vector<1x256xi32>
    %261 = arith.cmpi slt, %6, %260 : vector<1x256xi32>
    %262 = arith.andi %259, %261 : vector<1x256xi1>
    %c0_i32_68 = arith.constant 0 : i32
    %263 = vector.broadcast %c0_i32_68 : i32 to vector<1x256xi32>
    %264 = arith.cmpi sge, %7, %263 : vector<1x256xi32>
    %265 = arith.andi %262, %264 : vector<1x256xi1>
    %c16_i32_69 = arith.constant 16 : i32
    %266 = vector.broadcast %c16_i32_69 : i32 to vector<1x256xi32>
    %267 = arith.cmpi slt, %7, %266 : vector<1x256xi32>
    %268 = arith.andi %265, %267 : vector<1x256xi1>
    %269 = arith.extui %268 : vector<1x256xi1> to vector<1x256xi32>
    %270 = arith.sitofp %269 : vector<1x256xi32> to vector<1x256xf32>
    %271 = vector.broadcast %270 : vector<1x256xf32> to vector<8x256xf32>
    %272 = arith.mulf %257, %271 : vector<8x256xf32>
    %273 = arith.addf %256, %272 : vector<8x256xf32>
    %274 = vector.extract_strided_slice %185 {offsets = [40, 0], sizes = [8, 256], strides = [1, 1]} : vector<72x256xf32> to vector<8x256xf32>
    %c244_i32 = arith.constant 244 : i32
    %275 = tpu.dynamic_rotate %274 by %c244_i32 dim 1 : vector<8x256xf32>, i32 -> vector<8x256xf32>
    %c0_i32_70 = arith.constant 0 : i32
    %276 = vector.broadcast %c0_i32_70 : i32 to vector<1x256xi32>
    %277 = arith.cmpi sge, %6, %276 : vector<1x256xi32>
    %c16_i32_71 = arith.constant 16 : i32
    %278 = vector.broadcast %c16_i32_71 : i32 to vector<1x256xi32>
    %279 = arith.cmpi slt, %6, %278 : vector<1x256xi32>
    %280 = arith.andi %277, %279 : vector<1x256xi1>
    %c-12_i32_72 = arith.constant -12 : i32
    %281 = vector.broadcast %c-12_i32_72 : i32 to vector<1x256xi32>
    %282 = arith.cmpi sge, %7, %281 : vector<1x256xi32>
    %283 = arith.andi %280, %282 : vector<1x256xi1>
    %c4_i32_73 = arith.constant 4 : i32
    %284 = vector.broadcast %c4_i32_73 : i32 to vector<1x256xi32>
    %285 = arith.cmpi slt, %7, %284 : vector<1x256xi32>
    %286 = arith.andi %283, %285 : vector<1x256xi1>
    %287 = arith.extui %286 : vector<1x256xi1> to vector<1x256xi32>
    %288 = arith.sitofp %287 : vector<1x256xi32> to vector<1x256xf32>
    %289 = vector.broadcast %288 : vector<1x256xf32> to vector<8x256xf32>
    %290 = arith.mulf %275, %289 : vector<8x256xf32>
    %291 = arith.addf %273, %290 : vector<8x256xf32>
    %292 = vector.extract_strided_slice %185 {offsets = [48, 0], sizes = [8, 256], strides = [1, 1]} : vector<72x256xf32> to vector<8x256xf32>
    %c76_i32 = arith.constant 76 : i32
    %293 = tpu.dynamic_rotate %292 by %c76_i32 dim 1 : vector<8x256xf32>, i32 -> vector<8x256xf32>
    %c-12_i32_74 = arith.constant -12 : i32
    %294 = vector.broadcast %c-12_i32_74 : i32 to vector<1x256xi32>
    %295 = arith.cmpi sge, %6, %294 : vector<1x256xi32>
    %c4_i32_75 = arith.constant 4 : i32
    %296 = vector.broadcast %c4_i32_75 : i32 to vector<1x256xi32>
    %297 = arith.cmpi slt, %6, %296 : vector<1x256xi32>
    %298 = arith.andi %295, %297 : vector<1x256xi1>
    %c12_i32_76 = arith.constant 12 : i32
    %299 = vector.broadcast %c12_i32_76 : i32 to vector<1x256xi32>
    %300 = arith.cmpi sge, %7, %299 : vector<1x256xi32>
    %301 = arith.andi %298, %300 : vector<1x256xi1>
    %c28_i32_77 = arith.constant 28 : i32
    %302 = vector.broadcast %c28_i32_77 : i32 to vector<1x256xi32>
    %303 = arith.cmpi slt, %7, %302 : vector<1x256xi32>
    %304 = arith.andi %301, %303 : vector<1x256xi1>
    %305 = arith.extui %304 : vector<1x256xi1> to vector<1x256xi32>
    %306 = arith.sitofp %305 : vector<1x256xi32> to vector<1x256xf32>
    %307 = vector.broadcast %306 : vector<1x256xf32> to vector<8x256xf32>
    %308 = arith.mulf %293, %307 : vector<8x256xf32>
    %309 = arith.addf %291, %308 : vector<8x256xf32>
    %310 = vector.extract_strided_slice %185 {offsets = [56, 0], sizes = [8, 256], strides = [1, 1]} : vector<72x256xf32> to vector<8x256xf32>
    %c64_i32 = arith.constant 64 : i32
    %311 = tpu.dynamic_rotate %310 by %c64_i32 dim 1 : vector<8x256xf32>, i32 -> vector<8x256xf32>
    %c-12_i32_78 = arith.constant -12 : i32
    %312 = vector.broadcast %c-12_i32_78 : i32 to vector<1x256xi32>
    %313 = arith.cmpi sge, %6, %312 : vector<1x256xi32>
    %c4_i32_79 = arith.constant 4 : i32
    %314 = vector.broadcast %c4_i32_79 : i32 to vector<1x256xi32>
    %315 = arith.cmpi slt, %6, %314 : vector<1x256xi32>
    %316 = arith.andi %313, %315 : vector<1x256xi1>
    %c0_i32_80 = arith.constant 0 : i32
    %317 = vector.broadcast %c0_i32_80 : i32 to vector<1x256xi32>
    %318 = arith.cmpi sge, %7, %317 : vector<1x256xi32>
    %319 = arith.andi %316, %318 : vector<1x256xi1>
    %c16_i32_81 = arith.constant 16 : i32
    %320 = vector.broadcast %c16_i32_81 : i32 to vector<1x256xi32>
    %321 = arith.cmpi slt, %7, %320 : vector<1x256xi32>
    %322 = arith.andi %319, %321 : vector<1x256xi1>
    %323 = arith.extui %322 : vector<1x256xi1> to vector<1x256xi32>
    %324 = arith.sitofp %323 : vector<1x256xi32> to vector<1x256xf32>
    %325 = vector.broadcast %324 : vector<1x256xf32> to vector<8x256xf32>
    %326 = arith.mulf %311, %325 : vector<8x256xf32>
    %327 = arith.addf %309, %326 : vector<8x256xf32>
    %328 = vector.extract_strided_slice %185 {offsets = [64, 0], sizes = [8, 256], strides = [1, 1]} : vector<72x256xf32> to vector<8x256xf32>
    %c52_i32 = arith.constant 52 : i32
    %329 = tpu.dynamic_rotate %328 by %c52_i32 dim 1 : vector<8x256xf32>, i32 -> vector<8x256xf32>
    %c-12_i32_82 = arith.constant -12 : i32
    %330 = vector.broadcast %c-12_i32_82 : i32 to vector<1x256xi32>
    %331 = arith.cmpi sge, %6, %330 : vector<1x256xi32>
    %c4_i32_83 = arith.constant 4 : i32
    %332 = vector.broadcast %c4_i32_83 : i32 to vector<1x256xi32>
    %333 = arith.cmpi slt, %6, %332 : vector<1x256xi32>
    %334 = arith.andi %331, %333 : vector<1x256xi1>
    %c-12_i32_84 = arith.constant -12 : i32
    %335 = vector.broadcast %c-12_i32_84 : i32 to vector<1x256xi32>
    %336 = arith.cmpi sge, %7, %335 : vector<1x256xi32>
    %337 = arith.andi %334, %336 : vector<1x256xi1>
    %c4_i32_85 = arith.constant 4 : i32
    %338 = vector.broadcast %c4_i32_85 : i32 to vector<1x256xi32>
    %339 = arith.cmpi slt, %7, %338 : vector<1x256xi32>
    %340 = arith.andi %337, %339 : vector<1x256xi1>
    %341 = arith.extui %340 : vector<1x256xi1> to vector<1x256xi32>
    %342 = arith.sitofp %341 : vector<1x256xi32> to vector<1x256xf32>
    %343 = vector.broadcast %342 : vector<1x256xf32> to vector<8x256xf32>
    %344 = arith.mulf %329, %343 : vector<8x256xf32>
    %345 = arith.addf %327, %344 : vector<8x256xf32>
    %c2 = arith.constant 2 : index
    %c0_86 = arith.constant 0 : index
    %c0_87 = arith.constant 0 : index
    %346 = vector.load %arg3[%c2, %c0_86, %c0_87] : memref<4x72x8xbf16, #tpu.memory_space<vmem>>, vector<1x72x8xbf16>
    %347 = vector.shape_cast %346 : vector<1x72x8xbf16> to vector<72x8xbf16>
    %c2_88 = arith.constant 2 : index
    %c0_89 = arith.constant 0 : index
    %c0_90 = arith.constant 0 : index
    %348 = vector.load %arg4[%c2_88, %c0_89, %c0_90] : memref<4x72x8xbf16, #tpu.memory_space<vmem>>, vector<1x72x8xbf16>
    %349 = vector.shape_cast %348 : vector<1x72x8xbf16> to vector<72x8xbf16>
    %cst_91 = arith.constant dense<0.000000e+00> : vector<72x256xf32>
    %350 = tpu.matmul %347, %2, %cst_91 {dimension_numbers = #tpu.dot_dimension_numbers<[1], [0], [0], [1], [0, 0, 1, 1], [], []>} : vector<72x8xbf16>, vector<8x256xbf16>, vector<72x256xf32> -> vector<72x256xf32>
    %cst_92 = arith.constant dense<0.000000e+00> : vector<72x256xf32>
    %351 = tpu.matmul %347, %5, %cst_92 {dimension_numbers = #tpu.dot_dimension_numbers<[1], [0], [0], [1], [0, 0, 1, 1], [], []>} : vector<72x8xbf16>, vector<8x256xbf16>, vector<72x256xf32> -> vector<72x256xf32>
    %352 = arith.addf %350, %351 : vector<72x256xf32>
    %cst_93 = arith.constant dense<0.000000e+00> : vector<72x256xf32>
    %353 = tpu.matmul %349, %2, %cst_93 {dimension_numbers = #tpu.dot_dimension_numbers<[1], [0], [0], [1], [0, 0, 1, 1], [], []>} : vector<72x8xbf16>, vector<8x256xbf16>, vector<72x256xf32> -> vector<72x256xf32>
    %354 = arith.addf %352, %353 : vector<72x256xf32>
    %355 = vector.extract_strided_slice %354 {offsets = [32, 0], sizes = [8, 256], strides = [1, 1]} : vector<72x256xf32> to vector<8x256xf32>
    %c0_i32_94 = arith.constant 0 : i32
    %356 = vector.broadcast %c0_i32_94 : i32 to vector<1x256xi32>
    %357 = arith.cmpi sge, %6, %356 : vector<1x256xi32>
    %c16_i32_95 = arith.constant 16 : i32
    %358 = vector.broadcast %c16_i32_95 : i32 to vector<1x256xi32>
    %359 = arith.cmpi slt, %6, %358 : vector<1x256xi32>
    %360 = arith.andi %357, %359 : vector<1x256xi1>
    %c0_i32_96 = arith.constant 0 : i32
    %361 = vector.broadcast %c0_i32_96 : i32 to vector<1x256xi32>
    %362 = arith.cmpi sge, %7, %361 : vector<1x256xi32>
    %363 = arith.andi %360, %362 : vector<1x256xi1>
    %c16_i32_97 = arith.constant 16 : i32
    %364 = vector.broadcast %c16_i32_97 : i32 to vector<1x256xi32>
    %365 = arith.cmpi slt, %7, %364 : vector<1x256xi32>
    %366 = arith.andi %363, %365 : vector<1x256xi1>
    %367 = arith.extui %366 : vector<1x256xi1> to vector<1x256xi32>
    %368 = arith.sitofp %367 : vector<1x256xi32> to vector<1x256xf32>
    %369 = vector.broadcast %368 : vector<1x256xf32> to vector<8x256xf32>
    %370 = arith.mulf %355, %369 : vector<8x256xf32>
    %c3 = arith.constant 3 : index
    %c0_98 = arith.constant 0 : index
    %c0_99 = arith.constant 0 : index
    %371 = vector.load %arg3[%c3, %c0_98, %c0_99] : memref<4x72x8xbf16, #tpu.memory_space<vmem>>, vector<1x72x8xbf16>
    %372 = vector.shape_cast %371 : vector<1x72x8xbf16> to vector<72x8xbf16>
    %c3_100 = arith.constant 3 : index
    %c0_101 = arith.constant 0 : index
    %c0_102 = arith.constant 0 : index
    %373 = vector.load %arg4[%c3_100, %c0_101, %c0_102] : memref<4x72x8xbf16, #tpu.memory_space<vmem>>, vector<1x72x8xbf16>
    %374 = vector.shape_cast %373 : vector<1x72x8xbf16> to vector<72x8xbf16>
    %cst_103 = arith.constant dense<0.000000e+00> : vector<72x256xf32>
    %375 = tpu.matmul %372, %2, %cst_103 {dimension_numbers = #tpu.dot_dimension_numbers<[1], [0], [0], [1], [0, 0, 1, 1], [], []>} : vector<72x8xbf16>, vector<8x256xbf16>, vector<72x256xf32> -> vector<72x256xf32>
    %cst_104 = arith.constant dense<0.000000e+00> : vector<72x256xf32>
    %376 = tpu.matmul %372, %5, %cst_104 {dimension_numbers = #tpu.dot_dimension_numbers<[1], [0], [0], [1], [0, 0, 1, 1], [], []>} : vector<72x8xbf16>, vector<8x256xbf16>, vector<72x256xf32> -> vector<72x256xf32>
    %377 = arith.addf %375, %376 : vector<72x256xf32>
    %cst_105 = arith.constant dense<0.000000e+00> : vector<72x256xf32>
    %378 = tpu.matmul %374, %2, %cst_105 {dimension_numbers = #tpu.dot_dimension_numbers<[1], [0], [0], [1], [0, 0, 1, 1], [], []>} : vector<72x8xbf16>, vector<8x256xbf16>, vector<72x256xf32> -> vector<72x256xf32>
    %379 = arith.addf %377, %378 : vector<72x256xf32>
    %380 = vector.extract_strided_slice %379 {offsets = [32, 0], sizes = [8, 256], strides = [1, 1]} : vector<72x256xf32> to vector<8x256xf32>
    %c0_i32_106 = arith.constant 0 : i32
    %381 = vector.broadcast %c0_i32_106 : i32 to vector<1x256xi32>
    %382 = arith.cmpi sge, %6, %381 : vector<1x256xi32>
    %c16_i32_107 = arith.constant 16 : i32
    %383 = vector.broadcast %c16_i32_107 : i32 to vector<1x256xi32>
    %384 = arith.cmpi slt, %6, %383 : vector<1x256xi32>
    %385 = arith.andi %382, %384 : vector<1x256xi1>
    %c0_i32_108 = arith.constant 0 : i32
    %386 = vector.broadcast %c0_i32_108 : i32 to vector<1x256xi32>
    %387 = arith.cmpi sge, %7, %386 : vector<1x256xi32>
    %388 = arith.andi %385, %387 : vector<1x256xi1>
    %c16_i32_109 = arith.constant 16 : i32
    %389 = vector.broadcast %c16_i32_109 : i32 to vector<1x256xi32>
    %390 = arith.cmpi slt, %7, %389 : vector<1x256xi32>
    %391 = arith.andi %388, %390 : vector<1x256xi1>
    %392 = arith.extui %391 : vector<1x256xi1> to vector<1x256xi32>
    %393 = arith.sitofp %392 : vector<1x256xi32> to vector<1x256xf32>
    %394 = vector.broadcast %393 : vector<1x256xf32> to vector<8x256xf32>
    %395 = arith.mulf %380, %394 : vector<8x256xf32>
    %396 = arith.addf %176, %345 : vector<8x256xf32>
    %397 = arith.addf %370, %395 : vector<8x256xf32>
    %398 = arith.addf %396, %397 : vector<8x256xf32>
    %c0_i32_110 = arith.constant 0 : i32
    %399 = arith.cmpi eq, %arg1, %c0_i32_110 : i32
    %400 = arith.extui %399 : i1 to i32
    %c0_i32_111 = arith.constant 0 : i32
    %401 = arith.cmpi ne, %400, %c0_i32_111 : i32
    scf.if %401 {
      %c0_114 = arith.constant 0 : index
      %c0_115 = arith.constant 0 : index
      %405 = vector.load %arg6[%c0_114, %c0_115] : memref<8x1xf32, #tpu.memory_space<vmem>>, vector<8x1xf32>
      %406 = vector.broadcast %405 : vector<8x1xf32> to vector<8x256xf32>
      %407 = arith.addf %398, %406 : vector<8x256xf32>
      %c0_116 = arith.constant 0 : index
      %c0_117 = arith.constant 0 : index
      %c0_118 = arith.constant 0 : index
      %408 = vector.load %arg7[%c0_116, %c0_117, %c0_118] : memref<1x8x256xf32, #tpu.memory_space<vmem>>, vector<1x8x256xf32>
      %409 = vector.shape_cast %408 : vector<1x8x256xf32> to vector<8x256xf32>
      %410 = vector.shape_cast %407 : vector<8x256xf32> to vector<1x8x256xf32>
      tpu.vector_store %arg7[%c0_116, %c0_117, %c0_118], %410 {strides = array<i32>} : memref<1x8x256xf32, #tpu.memory_space<vmem>>, vector<1x8x256xf32>,
    } else {
    }
    %c0_i32_112 = arith.constant 0 : i32
    %402 = arith.cmpi sgt, %arg1, %c0_i32_112 : i32
    %403 = arith.extui %402 : i1 to i32
    %c0_i32_113 = arith.constant 0 : i32
    %404 = arith.cmpi ne, %403, %c0_i32_113 : i32
    scf.if %404 {
      %c0_114 = arith.constant 0 : index
      %c0_115 = arith.constant 0 : index
      %c0_116 = arith.constant 0 : index
      %405 = vector.load %arg7[%c0_114, %c0_115, %c0_116] : memref<1x8x256xf32, #tpu.memory_space<vmem>>, vector<1x8x256xf32>
      %406 = vector.shape_cast %405 : vector<1x8x256xf32> to vector<8x256xf32>
      %407 = arith.addf %406, %398 : vector<8x256xf32>
      %c0_117 = arith.constant 0 : index
      %c0_118 = arith.constant 0 : index
      %c0_119 = arith.constant 0 : index
      %408 = vector.load %arg7[%c0_117, %c0_118, %c0_119] : memref<1x8x256xf32, #tpu.memory_space<vmem>>, vector<1x8x256xf32>
      %409 = vector.shape_cast %408 : vector<1x8x256xf32> to vector<8x256xf32>
      %410 = vector.shape_cast %407 : vector<8x256xf32> to vector<1x8x256xf32>
      tpu.vector_store %arg7[%c0_117, %c0_118, %c0_119], %410 {strides = array<i32>} : memref<1x8x256xf32, #tpu.memory_space<vmem>>, vector<1x8x256xf32>,
    } else {
    }
    return
  }
  func.func @transform_0(%arg0: i32, %arg1: i32) -> (i32, i32, i32) {
    %c0_i32 = arith.constant 0 : i32
    %c0_i32_0 = arith.constant 0 : i32
    return %arg0, %arg1, %c0_i32 : i32, i32, i32
  }
  func.func @transform_1(%arg0: i32, %arg1: i32) -> (i32, i32, i32) {
    %c0_i32 = arith.constant 0 : i32
    %c0_i32_0 = arith.constant 0 : i32
    %c0_i32_1 = arith.constant 0 : i32
    return %c0_i32, %c0_i32_0, %arg1 : i32, i32, i32
  }
  func.func @transform_2(%arg0: i32, %arg1: i32) -> (i32, i32, i32) {
    %c0_i32 = arith.constant 0 : i32
    %c0_i32_0 = arith.constant 0 : i32
    %c0_i32_1 = arith.constant 0 : i32
    return %c0_i32, %c0_i32_0, %arg1 : i32, i32, i32
  }
  func.func @transform_3(%arg0: i32, %arg1: i32) -> (i32, i32) {
    %c0_i32 = arith.constant 0 : i32
    %c0_i32_0 = arith.constant 0 : i32
    %c0_i32_1 = arith.constant 0 : i32
    return %c0_i32, %c0_i32_0 : i32, i32
  }
  func.func @transform_4(%arg0: i32, %arg1: i32) -> (i32, i32) {
    %c0_i32 = arith.constant 0 : i32
    %c0_i32_0 = arith.constant 0 : i32
    %c0_i32_1 = arith.constant 0 : i32
    return %c0_i32, %c0_i32_0 : i32, i32
  }
  func.func @transform_5(%arg0: i32, %arg1: i32) -> (i32, i32, i32) {
    %c0_i32 = arith.constant 0 : i32
    %c0_i32_0 = arith.constant 0 : i32
    %c0_i32_1 = arith.constant 0 : i32
    return %arg0, %c0_i32, %c0_i32_0 : i32, i32, i32
  }
}

</mosaic_0001>

<llo_original>
// kernel: tpu_custom_call.1
$region0: #{tpu_custom_call.1}
  #allocation0 [shape = 'u32[]', space=smem, size = 0x4, offset = 0x4, fixed_abs, tag = 'smem constant byte address 0x4 - core index']
  #allocation1 [shape = 'u32[144,128]{1,0:T(1,128)}', space=vmem, size = 0x12000, scoped, tag = 'internal scratch']
  %s0 = inlined_call_operand.vmem [shape: f32[2,8,256], index: 0, kind: input, shape index: {}]
  %s1 = inlined_call_operand.vmem [shape: bf16[4,72,8], index: 1, kind: input, shape index: {}]
  %s2 = inlined_call_operand.vmem [shape: bf16[4,72,8], index: 2, kind: input, shape index: {}]
  %s3 = inlined_call_operand.vmem [shape: s32[2,256], index: 3, kind: input, shape index: {}]
  %s4 = inlined_call_operand.vmem [shape: f32[8,1], index: 4, kind: input, shape index: {}]
  %s5 = inlined_call_operand.hbm [shape: f32[2,8,256], index: 5, kind: output, shape index: {}]
  %s6 = sld [smem:[#allocation0]]
  $region61: #{tpu_custom_call.1} parent=0
    _
  %s8 = ssub.s32 1, %s6
  %s9 = scalar_select 0, %s8, %s6
  $region1: #{tpu_custom_call.1} parent=0
    #allocation2 [shape = 'u8[16384]{0}', space=vmem, size = 0x4000, scoped, tag = 'output window, operand 0']
    #allocation3 [shape = 's32[2]{0}', space=sflag, size = 0x8, scoped, tag = 'scoped memory for tpu_custom_call.1']
    %10 = vsyncpa [#allocation3], 0
    %s11 = scalar_lea.sflag [#allocation3], 1
    %12 = vsyncpa %s11, 0
    loop: start=0, step=1, limit=4
    $region2: #{tpu_custom_call.1} parent=1 // loop_pre_header
      _
    $region3: #{tpu_custom_call.1} parent=1 // loop_header
      %s14 = sphi 0, %s18
      %p15 = scmp.ge.s32.totalorder %s14, 4
      %s21 = sphi 0, %s33
      %s22 = sphi 0, %s29
      %s23 = sphi 0, %s21
      %s24 = sphi 0, %s22
      %s25 = sphi 0, %s23
      %s26 = sphi 0, %s24
      %s38 = sphi 0, %s40
      %s41 = sphi 0, %s38
      %s42 = sphi 0, %s41
      %s58 = sphi 0, %s42
      %s64 = sphi 0, %s66
      %s67 = sphi 0, %s64
      %s68 = sphi 0, %s67
      %s84 = sphi 0, %s68
      %s90 = sphi 0, %s92
      %s93 = sphi 0, %s90
      %s94 = sphi 0, %s93
      %s110 = sphi 0, %s94
      %s114 = sphi 0, %s114
      %s116 = sphi 0, %s114
      %s117 = sphi 0, %s116
      %s131 = sphi 0, %s117
      %s135 = sphi 0, %s135
      %s137 = sphi 0, %s135
      %s138 = sphi 0, %s137
      %s152 = sphi 0, %s138
      %s158 = sphi 0, %s160
      %s161 = sphi 0, %s158
      %s162 = sphi 0, %s161
      %s178 = sphi 0, %s162
    $region4: #{tpu_custom_call.1} parent=1 // loop_header_branch
      %17 = sbr.rel (%p15) target = $region8
    $region5: #{tpu_custom_call.1} parent=1 // loop_body
      %s19 = ssub.s32 %s14, 1
      %s20 = ssub.s32 %s14, 2
      %s27 = sadd.s32 1, %s22
      %p28 = scmp.ge.s32.totalorder %s27, 1
      %s29 = scalar_select %p28, 0, %s27
      %s30 = sadd.s32 1, %s21
      %s31 = scalar_select %p28, %s30, %s21
      %p32 = scmp.ge.s32.totalorder %s31, 2
      %s33 = scalar_select %p32, 0, %s31
      %s34 = ssub.s32 %s21, %s33
      %s35 = ssub.s32 %s22, %s29
      %s36 = sor.u32 %s34, %s35
      %p37 = scmp.eq.s32.totalorder %s36, 0
      %s39 = sadd.s32 %s38, 1
      %s40 = scalar_select %p37, %s38, %s39
      %p43 = pneg %p37
      %p44 = scmp.eq.s32.totalorder %s14, 1
      %p45 = por %p43, %p44
      %p46 = scmp.ne.s32.totalorder %s38, %s41
      %p47 = scmp.eq.s32.totalorder %s14, 0
      %p48 = por %p46, %p47
      %p49 = scmp.ne.s32.totalorder %s38, %s41
      %p50 = scmp.eq.s32.totalorder %s19, 1
      %p51 = por %p49, %p50
      %p52 = scmp.ne.s32.totalorder %s41, %s42
      %p53 = scmp.eq.s32.totalorder %s19, 0
      %p54 = por %p52, %p53
      %p55 = scmp.ne.s32.totalorder %s41, %s42
      %p56 = scmp.eq.s32.totalorder %s20, 1
      %p57 = por %p55, %p56
      %p59 = scmp.ne.s32.totalorder %s42, %s58
      %p60 = scmp.eq.s32.totalorder %s20, 0
      %p61 = por %p59, %p60
      %s62 = ssub.s32 %s22, %s29
      %p63 = scmp.eq.s32.totalorder %s62, 0
      %s65 = sadd.s32 %s64, 1
      %s66 = scalar_select %p63, %s64, %s65
      %p69 = pneg %p63
      %p70 = scmp.eq.s32.totalorder %s14, 1
      %p71 = por %p69, %p70
      %p72 = scmp.ne.s32.totalorder %s64, %s67
      %p73 = scmp.eq.s32.totalorder %s14, 0
      %p74 = por %p72, %p73
      %p75 = scmp.ne.s32.totalorder %s64, %s67
      %p76 = scmp.eq.s32.totalorder %s19, 1
      %p77 = por %p75, %p76
      %p78 = scmp.ne.s32.totalorder %s67, %s68
      %p79 = scmp.eq.s32.totalorder %s19, 0
      %p80 = por %p78, %p79
      %p81 = scmp.ne.s32.totalorder %s67, %s68
      %p82 = scmp.eq.s32.totalorder %s20, 1
      %p83 = por %p81, %p82
      %p85 = scmp.ne.s32.totalorder %s68, %s84
      %p86 = scmp.eq.s32.totalorder %s20, 0
      %p87 = por %p85, %p86
      %s88 = ssub.s32 %s22, %s29
      %p89 = scmp.eq.s32.totalorder %s88, 0
      %s91 = sadd.s32 %s90, 1
      %s92 = scalar_select %p89, %s90, %s91
      %p95 = pneg %p89
      %p96 = scmp.eq.s32.totalorder %s14, 1
      %p97 = por %p95, %p96
      %p98 = scmp.ne.s32.totalorder %s90, %s93
      %p99 = scmp.eq.s32.totalorder %s14, 0
      %p100 = por %p98, %p99
      %p101 = scmp.ne.s32.totalorder %s90, %s93
      %p102 = scmp.eq.s32.totalorder %s19, 1
      %p103 = por %p101, %p102
      %p104 = scmp.ne.s32.totalorder %s93, %s94
      %p105 = scmp.eq.s32.totalorder %s19, 0
      %p106 = por %p104, %p105
      %p107 = scmp.ne.s32.totalorder %s93, %s94
      %p108 = scmp.eq.s32.totalorder %s20, 1
      %p109 = por %p107, %p108
      %p111 = scmp.ne.s32.totalorder %s94, %s110
      %p112 = scmp.eq.s32.totalorder %s20, 0
      %p113 = por %p111, %p112
      %s115 = sadd.s32 %s114, 1
      %p118 = scmp.eq.s32.totalorder %s14, 1
      %p119 = scmp.ne.s32.totalorder %s114, %s116
      %p120 = scmp.eq.s32.totalorder %s14, 0
      %p121 = por %p119, %p120
      %p122 = scmp.ne.s32.totalorder %s114, %s116
      %p123 = scmp.eq.s32.totalorder %s19, 1
      %p124 = por %p122, %p123
      %p125 = scmp.ne.s32.totalorder %s116, %s117
      %p126 = scmp.eq.s32.totalorder %s19, 0
      %p127 = por %p125, %p126
      %p128 = scmp.ne.s32.totalorder %s116, %s117
      %p129 = scmp.eq.s32.totalorder %s20, 1
      %p130 = por %p128, %p129
      %p132 = scmp.ne.s32.totalorder %s117, %s131
      %p133 = scmp.eq.s32.totalorder %s20, 0
      %p134 = por %p132, %p133
      %s136 = sadd.s32 %s135, 1
      %p139 = scmp.eq.s32.totalorder %s14, 1
      %p140 = scmp.ne.s32.totalorder %s135, %s137
      %p141 = scmp.eq.s32.totalorder %s14, 0
      %p142 = por %p140, %p141
      %p143 = scmp.ne.s32.totalorder %s135, %s137
      %p144 = scmp.eq.s32.totalorder %s19, 1
      %p145 = por %p143, %p144
      %p146 = scmp.ne.s32.totalorder %s137, %s138
      %p147 = scmp.eq.s32.totalorder %s19, 0
      %p148 = por %p146, %p147
      %p149 = scmp.ne.s32.totalorder %s137, %s138
      %p150 = scmp.eq.s32.totalorder %s20, 1
      %p151 = por %p149, %p150
      %p153 = scmp.ne.s32.totalorder %s138, %s152
      %p154 = scmp.eq.s32.totalorder %s20, 0
      %p155 = por %p153, %p154
      %s156 = ssub.s32 %s21, %s33
      %p157 = scmp.eq.s32.totalorder %s156, 0
      %s159 = sadd.s32 %s158, 1
      %s160 = scalar_select %p157, %s158, %s159
      %p163 = pneg %p157
      %p164 = scmp.eq.s32.totalorder %s14, 1
      %p165 = por %p163, %p164
      %p166 = scmp.ne.s32.totalorder %s158, %s161
      %p167 = scmp.eq.s32.totalorder %s14, 0
      %p168 = por %p166, %p167
      %p169 = scmp.ne.s32.totalorder %s158, %s161
      %p170 = scmp.eq.s32.totalorder %s19, 1
      %p171 = por %p169, %p170
      %p172 = scmp.ne.s32.totalorder %s161, %s162
      %p173 = scmp.eq.s32.totalorder %s19, 0
      %p174 = por %p172, %p173
      %p175 = scmp.ne.s32.totalorder %s161, %s162
      %p176 = scmp.eq.s32.totalorder %s20, 1
      %p177 = por %p175, %p176
      %p179 = scmp.ne.s32.totalorder %s162, %s178
      %p180 = scmp.eq.s32.totalorder %s20, 0
      %p181 = por %p179, %p180
      %p182 = scmp.le.s32.totalorder 1, %s14
      %p183 = scmp.lt.s32.totalorder %s14, 3
      %p184 = pnand %p182, %p183
      %p185 = pneg %p184
      // Predicated region
      $region9: #{tpu_custom_call.1} parent=5 // pred_check
        _
      $region10: #{tpu_custom_call.1} parent=5 // pred_check_branch
        %187 = sbr.rel (%p184) target = $region12
      $region11: #{tpu_custom_call.1} parent=5 // pred_region
        %s188 = ssub.s32 %s14, 1
        // Predicated region
        $region13: #{tpu_custom_call.1} parent=11 // pred_check
          %p189 = pneg %p80
        $region14: #{tpu_custom_call.1} parent=11 // pred_check_branch
          %191 = sbr.rel (%p189) target = $region16
        $region15: #{tpu_custom_call.1} parent=11 // pred_region
          %p192 = scmp.lt.s32.totalorder %s24, 0
          %s193 = scalar_select %p192, %s24, 0
          %s194 = smul.addr %s193, 4
          %s195 = scalar_lea.vmem %s1, %s194
        $region16: #{tpu_custom_call.1} parent=11 // pred_fallthru
          _
        // Predicated region
        $region17: #{tpu_custom_call.1} parent=11 // pred_check
          %p196 = pneg %p106
        $region18: #{tpu_custom_call.1} parent=11 // pred_check_branch
          %198 = sbr.rel (%p196) target = $region20
        $region19: #{tpu_custom_call.1} parent=11 // pred_region
          %p199 = scmp.lt.s32.totalorder %s24, 0
          %s200 = scalar_select %p199, %s24, 0
          %s201 = smul.addr %s200, 4
          %s202 = scalar_lea.vmem %s2, %s201
        $region20: #{tpu_custom_call.1} parent=11 // pred_fallthru
          _
        // Predicated region
        $region21: #{tpu_custom_call.1} parent=11 // pred_check
          %p203 = pneg %p127
        $region22: #{tpu_custom_call.1} parent=11 // pred_check_branch
          %205 = sbr.rel (%p203) target = $region24
        $region23: #{tpu_custom_call.1} parent=11 // pred_region
          _
        $region24: #{tpu_custom_call.1} parent=11 // pred_fallthru
          _
        // Predicated region
        $region25: #{tpu_custom_call.1} parent=11 // pred_check
          %p206 = pneg %p148
        $region26: #{tpu_custom_call.1} parent=11 // pred_check_branch
          %208 = sbr.rel (%p206) target = $region28
        $region27: #{tpu_custom_call.1} parent=11 // pred_region
          _
        $region28: #{tpu_custom_call.1} parent=11 // pred_fallthru
          _
      $region12: #{tpu_custom_call.1} parent=5 // pred_fallthru
        _
      %p209 = scmp.lt.s32.totalorder %s14, 2
      // Predicated region
      $region29: #{tpu_custom_call.1} parent=5 // pred_check
        %p210 = pneg %p209
      $region30: #{tpu_custom_call.1} parent=5 // pred_check_branch
        %212 = sbr.rel (%p210) target = $region32
      $region31: #{tpu_custom_call.1} parent=5 // pred_region
        // Predicated region
        $region33: #{tpu_custom_call.1} parent=31 // pred_check
          %p213 = pneg %p48
        $region34: #{tpu_custom_call.1} parent=31 // pred_check_branch
          %215 = sbr.rel (%p213) target = $region36
        $region35: #{tpu_custom_call.1} parent=31 // pred_region
          %p216 = scmp.lt.s32.totalorder %s21, 1
          %s217 = scalar_select %p216, %s21, 1
          %p218 = scmp.lt.s32.totalorder %s22, 0
          %s219 = scalar_select %p218, %s22, 0
          %s220 = smul.addr %s219, 2
          %s221 = smul.addr %s217, 2
          %s222 = sadd.s32 %s220, %s221
          %s223 = smul.addr %s222, 8
          %s224 = scalar_lea.vmem %s0, %s223
        $region36: #{tpu_custom_call.1} parent=31 // pred_fallthru
          _
      $region32: #{tpu_custom_call.1} parent=5 // pred_fallthru
        _
      %p225 = scmp.le.s32.totalorder 1, %s14
      %p226 = scmp.lt.s32.totalorder %s14, 3
      %p227 = pnand %p225, %p226
      %p228 = pneg %p227
      // Predicated region
      $region37: #{tpu_custom_call.1} parent=5 // pred_check
        _
      $region38: #{tpu_custom_call.1} parent=5 // pred_check_branch
        %230 = sbr.rel (%p227) target = $region40
      $region39: #{tpu_custom_call.1} parent=5 // pred_region
        %s231 = ssub.s32 %s14, 1
        %p232 = scmp.lt.s32.totalorder %s23, 1
        %s233 = scalar_select %p232, %s23, 1
        %p234 = scmp.lt.s32.totalorder %s24, 0
        %s235 = scalar_select %p234, %s24, 0
        %s236 = smul.addr %s235, 2
        %s237 = smul.addr %s233, 2
        %s238 = sadd.s32 %s236, %s237
        %s239 = smul.addr %s238, 8
        %s240 = scalar_lea.vmem %s0, %s239
        %p241 = pneg %p54
        %p242 = pneg %p51
        %p243 = scmp.lt.s32.totalorder %s24, 0
        %s244 = scalar_select %p243, %s24, 0
        %s245 = smul.addr %s244, 4
        %s246 = scalar_lea.vmem %s1, %s245
        %p247 = pneg %p80
        %p248 = pneg %p77
        %p249 = scmp.lt.s32.totalorder %s24, 0
        %s250 = scalar_select %p249, %s24, 0
        %s251 = smul.addr %s250, 4
        %s252 = scalar_lea.vmem %s2, %s251
        %p253 = pneg %p106
        %p254 = pneg %p103
        %p255 = pneg %p127
        %p256 = pneg %p124
        %p257 = pneg %p148
        %p258 = pneg %p145
        %p259 = pneg %p174
        %p260 = pneg %p171
        %s261 = sand.u32 %s161, 1
        %s262 = scalar_lea.sflag [#allocation3], %s261
        %s263 = sand.u32 %s161, 1
        %s264 = smul.addr %s263, 16
        %s265 = scalar_lea.vmem [#allocation2], %s264
        %p266 = scmp.lt.s32.totalorder %s23, 1
        %s267 = scalar_select %p266, %s23, 1
        %p268 = scmp.lt.s32.totalorder %s24, 0
        %s269 = scalar_select %p268, %s24, 0
        %s270 = smul.addr %s269, 2
        %s271 = smul.addr %s267, 2
        %s272 = sadd.s32 %s270, %s271
        %s273 = smul.addr %s272, 8
        %s274 = scalar_lea.vmem %s0, %s273
        %p275 = scmp.lt.s32.totalorder %s24, 0
        %s276 = scalar_select %p275, %s24, 0
        %s277 = smul.addr %s276, 4
        %s278 = scalar_lea.vmem %s1, %s277
        %p279 = scmp.lt.s32.totalorder %s24, 0
        %s280 = scalar_select %p279, %s24, 0
        %s281 = smul.addr %s280, 4
        %s282 = scalar_lea.vmem %s2, %s281
        %v284 = vld [vmem:[%s274] sm:$0xff]
        %v285 = vld [vmem:[%s274 + $0x8] sm:$0xff]
        %v286 = vpack.c.bf16 %v284, %v284
        %v287 = vpack.c.bf16 %v285, %v285
        %v288 = vunpack.c.l.bf16 %v286
        %v289 = vunpack.c.l.bf16 %v287
        %v290 = vsub.f32 %v284, %v288
        %v291 = vsub.f32 %v285, %v289
        %v292 = vpack.c.bf16 %v290, %v290
        %v293 = vpack.c.bf16 %v291, %v291
        %v294 = vld [vmem:[%s3] ss:$2 sm:$0x3]
        %s295 = scalar_lea.vmem %s3, 1
        %v296 = vld [vmem:[%s295] ss:$2 sm:$0x3]
        %v297 = vld [vmem:[%s278] sm:$0xf]
        %v298 = vld [vmem:[%s278 + $0x4] sm:$0xf]
        %v299 = vld [vmem:[%s278 + $0x8] sm:$0xf]
        %v300 = vld [vmem:[%s278 + $0xc] sm:$0xf]
        %v301 = vld [vmem:[%s278 + $0x10] sm:$0xf]
        %v302 = vld [vmem:[%s278 + $0x14] sm:$0xf]
        %v303 = vld [vmem:[%s278 + $0x18] sm:$0xf]
        %v304 = vld [vmem:[%s278 + $0x1c] sm:$0xf]
        %v305 = vld [vmem:[%s278 + $0x20] sm:$0xf]
        %v306 = vld [vmem:[%s282] sm:$0xf]
        %v307 = vld [vmem:[%s282 + $0x4] sm:$0xf]
        %v308 = vld [vmem:[%s282 + $0x8] sm:$0xf]
        %v309 = vld [vmem:[%s282 + $0xc] sm:$0xf]
        %v310 = vld [vmem:[%s282 + $0x10] sm:$0xf]
        %v311 = vld [vmem:[%s282 + $0x14] sm:$0xf]
        %v312 = vld [vmem:[%s282 + $0x18] sm:$0xf]
        %v313 = vld [vmem:[%s282 + $0x1c] sm:$0xf]
        %v314 = vld [vmem:[%s282 + $0x20] sm:$0xf]
        %v324 = vunpack.c.l.b16 %v297
        %v325 = vunpack.c.l.b16 %v298
        %v326 = vunpack.c.l.b16 %v299
        %v327 = vunpack.c.l.b16 %v300
        %v328 = vunpack.c.l.b16 %v301
        %v329 = vunpack.c.l.b16 %v302
        %v330 = vunpack.c.l.b16 %v303
        %v331 = vunpack.c.l.b16 %v304
        %v332 = vunpack.c.l.b16 %v305
        %v333 = vpack.c.b16 %v325, %v324
        %v334 = vpack.c.b16 %v327, %v326
        %v335 = vpack.c.b16 %v329, %v328
        %v336 = vpack.c.b16 %v331, %v330
        %v337 = vpack.c.b16 %v332, %v332
        %vm338 = vcmask 64512
        %v340 = vsel %vm338, %v333, 0
        %v343 = vsel %vm338, %v334, 0
        %v346 = vsel %vm338, %v335, 0
        %v349 = vsel %vm338, %v336, 0
        %v352 = vsel %vm338, %v337, 0
        %vm354 = vcmask 1043456
        %v356 = vsel %vm354, %v292, 0
        %v359 = vsel %vm354, %v293, 0
        %361 = vmatprep.subr.bf16.mxu0 %v359
        %362 = vmatpush1.bf16.msra.mxu0 %v356
        %363 = vmatprep.subr.bf16.mxu0 0
        %364 = vmatpush1.bf16.msra.mxu0 0
        %365 = vmatprep.subr.bf16.mxu0 0
        %366 = vmatpush1.bf16.msra.mxu0 0
        %367 = vmatprep.subr.bf16.mxu0 0
        %368 = vmatpush1.bf16.msra.mxu0 0
        %369 = vmatprep.subr.bf16.mxu0 0
        %370 = vmatpush1.bf16.msra.mxu0 0
        %371 = vmatprep.subr.bf16.mxu0 0
        %372 = vmatpush1.bf16.msra.mxu0 0
        %373 = vmatprep.subr.bf16.mxu0 0
        %374 = vmatpush1.bf16.msra.mxu0 0
        %375 = vmatprep.subr.bf16.mxu0 0
        %376 = vmatpush1.bf16.msra.mxu0 0
        %377 = vmatprep.subr.bf16.mxu0 0
        %378 = vmatpush1.bf16.msra.mxu0 0
        %379 = vmatprep.subr.bf16.mxu0 0
        %380 = vmatpush1.bf16.msra.mxu0 0
        %381 = vmatprep.subr.bf16.mxu0 0
        %382 = vmatpush1.bf16.msra.mxu0 0
        %383 = vmatprep.subr.bf16.mxu0 0
        %384 = vmatpush1.bf16.msra.mxu0 0
        %385 = vmatprep.subr.bf16.mxu0 0
        %386 = vmatpush1.bf16.msra.mxu0 0
        %387 = vmatprep.subr.bf16.mxu0 0
        %388 = vmatpush1.bf16.msra.mxu0 0
        %389 = vmatprep.subr.bf16.mxu0 0
        %390 = vmatpush1.bf16.msra.mxu0 0
        %391 = vmatprep.subr.bf16.mxu0 0
        %392 = vmatpush1.bf16.msra.mxu0 0
        %393 = vmatprep.mubr.bf16.mxu0 0
        %394 = vmatmul.mubr.bf16.gmra.mrb[0].mxu0 %v340
        %v395 = vpop.f32.mrb[0].mxu0
        %v396 = vadd.f32 0.0, %v395
        %v397 = vpop.f32.mrb[0].mxu0
        %v398 = vadd.f32 0.0, %v397
        %v399 = vpop.f32.mrb[0].mxu0
        %v400 = vadd.f32 0.0, %v399
        %v401 = vpop.f32.mrb[0].mxu0
        %v402 = vadd.f32 0.0, %v401
        %403 = vmatprep.mubr.bf16.mxu0 0
        %404 = vmatmul.mubr.bf16.gmra.mrb[0].mxu0 %v343
        %v405 = vpop.f32.mrb[0].mxu0
        %v406 = vadd.f32 0.0, %v405
        %v407 = vpop.f32.mrb[0].mxu0
        %v408 = vadd.f32 0.0, %v407
        %v409 = vpop.f32.mrb[0].mxu0
        %v410 = vadd.f32 0.0, %v409
        %v411 = vpop.f32.mrb[0].mxu0
        %v412 = vadd.f32 0.0, %v411
        %413 = vmatprep.mubr.bf16.mxu0 0
        %414 = vmatmul.mubr.bf16.gmra.mrb[0].mxu0 %v346
        %v415 = vpop.f32.mrb[0].mxu0
        %v416 = vadd.f32 0.0, %v415
        %v417 = vpop.f32.mrb[0].mxu0
        %v418 = vadd.f32 0.0, %v417
        %v419 = vpop.f32.mrb[0].mxu0
        %v420 = vadd.f32 0.0, %v419
        %v421 = vpop.f32.mrb[0].mxu0
        %v422 = vadd.f32 0.0, %v421
        %423 = vmatprep.mubr.bf16.mxu0 0
        %424 = vmatmul.mubr.bf16.gmra.mrb[0].mxu0 %v349
        %v425 = vpop.f32.mrb[0].mxu0
        %v426 = vadd.f32 0.0, %v425
        %v427 = vpop.f32.mrb[0].mxu0
        %v428 = vadd.f32 0.0, %v427
        %v429 = vpop.f32.mrb[0].mxu0
        %v430 = vadd.f32 0.0, %v429
        %v431 = vpop.f32.mrb[0].mxu0
        %v432 = vadd.f32 0.0, %v431
        %433 = vmatprep.mubr.bf16.mxu0 0
        %434 = vmatmul.mubr.bf16.gmra.mrb[0].mxu0 %v352
        %v435 = vpop.f32.mrb[0].mxu0
        %v436 = vadd.f32 0.0, %v435
        %v437 = vpop.f32.mrb[0].mxu0
        %v438 = vadd.f32 0.0, %v437
        %v439 = vpop.f32.mrb[0].mxu0
        %v440 = vpop.f32.mrb[0].mxu0
        %441 = vdwg.mxu0
        %v443 = vsel %vm354, %v286, 0
        %v446 = vsel %vm354, %v287, 0
        %448 = vmatprep.subr.bf16.mxu0 %v446
        %449 = vmatpush1.bf16.msra.mxu0 %v443
        %450 = vmatprep.subr.bf16.mxu0 0
        %451 = vmatpush1.bf16.msra.mxu0 0
        %452 = vmatprep.subr.bf16.mxu0 0
        %453 = vmatpush1.bf16.msra.mxu0 0
        %454 = vmatprep.subr.bf16.mxu0 0
        %455 = vmatpush1.bf16.msra.mxu0 0
        %456 = vmatprep.subr.bf16.mxu0 0
        %457 = vmatpush1.bf16.msra.mxu0 0
        %458 = vmatprep.subr.bf16.mxu0 0
        %459 = vmatpush1.bf16.msra.mxu0 0
        %460 = vmatprep.subr.bf16.mxu0 0
        %461 = vmatpush1.bf16.msra.mxu0 0
        %462 = vmatprep.subr.bf16.mxu0 0
        %463 = vmatpush1.bf16.msra.mxu0 0
        %464 = vmatprep.subr.bf16.mxu0 0
        %465 = vmatpush1.bf16.msra.mxu0 0
        %466 = vmatprep.subr.bf16.mxu0 0
        %467 = vmatpush1.bf16.msra.mxu0 0
        %468 = vmatprep.subr.bf16.mxu0 0
        %469 = vmatpush1.bf16.msra.mxu0 0
        %470 = vmatprep.subr.bf16.mxu0 0
        %471 = vmatpush1.bf16.msra.mxu0 0
        %472 = vmatprep.subr.bf16.mxu0 0
        %473 = vmatpush1.bf16.msra.mxu0 0
        %474 = vmatprep.subr.bf16.mxu0 0
        %475 = vmatpush1.bf16.msra.mxu0 0
        %476 = vmatprep.subr.bf16.mxu0 0
        %477 = vmatpush1.bf16.msra.mxu0 0
        %478 = vmatprep.subr.bf16.mxu0 0
        %479 = vmatpush1.bf16.msra.mxu0 0
        %480 = vmatprep.mubr.bf16.mxu0 0
        %481 = vmatmul.mubr.bf16.gmra.mrb[0].mxu0 %v340
        %v482 = vpop.f32.mrb[0].mxu0
        %v483 = vadd.f32 %v396, %v482
        %v484 = vpop.f32.mrb[0].mxu0
        %v485 = vadd.f32 %v398, %v484
        %v486 = vpop.f32.mrb[0].mxu0
        %v487 = vadd.f32 %v400, %v486
        %v488 = vpop.f32.mrb[0].mxu0
        %v489 = vadd.f32 %v402, %v488
        %490 = vmatprep.mubr.bf16.mxu0 0
        %491 = vmatmul.mubr.bf16.gmra.mrb[0].mxu0 %v343
        %v492 = vpop.f32.mrb[0].mxu0
        %v493 = vadd.f32 %v406, %v492
        %v494 = vpop.f32.mrb[0].mxu0
        %v495 = vadd.f32 %v408, %v494
        %v496 = vpop.f32.mrb[0].mxu0
        %v497 = vadd.f32 %v410, %v496
        %v498 = vpop.f32.mrb[0].mxu0
        %v499 = vadd.f32 %v412, %v498
        %500 = vmatprep.mubr.bf16.mxu0 0
        %501 = vmatmul.mubr.bf16.gmra.mrb[0].mxu0 %v346
        %v502 = vpop.f32.mrb[0].mxu0
        %v503 = vadd.f32 %v416, %v502
        %v504 = vpop.f32.mrb[0].mxu0
        %v505 = vadd.f32 %v418, %v504
        %v506 = vpop.f32.mrb[0].mxu0
        %v507 = vadd.f32 %v420, %v506
        %v508 = vpop.f32.mrb[0].mxu0
        %v509 = vadd.f32 %v422, %v508
        %510 = vmatprep.mubr.bf16.mxu0 0
        %511 = vmatmul.mubr.bf16.gmra.mrb[0].mxu0 %v349
        %v512 = vpop.f32.mrb[0].mxu0
        %v513 = vadd.f32 %v426, %v512
        %v514 = vpop.f32.mrb[0].mxu0
        %v515 = vadd.f32 %v428, %v514
        %v516 = vpop.f32.mrb[0].mxu0
        %v517 = vadd.f32 %v430, %v516
        %v518 = vpop.f32.mrb[0].mxu0
        %v519 = vadd.f32 %v432, %v518
        %520 = vmatprep.mubr.bf16.mxu0 0
        %521 = vmatmul.mubr.bf16.gmra.mrb[0].mxu0 %v352
        %v522 = vpop.f32.mrb[0].mxu0
        %v523 = vadd.f32 %v436, %v522
        %v524 = vpop.f32.mrb[0].mxu0
        %v525 = vadd.f32 %v438, %v524
        %v526 = vpop.f32.mrb[0].mxu0
        %v527 = vpop.f32.mrb[0].mxu0
        %528 = vdwg.mxu0
        %v538 = vunpack.c.l.b16 %v306
        %v539 = vunpack.c.l.b16 %v307
        %v540 = vunpack.c.l.b16 %v308
        %v541 = vunpack.c.l.b16 %v309
        %v542 = vunpack.c.l.b16 %v310
        %v543 = vunpack.c.l.b16 %v311
        %v544 = vunpack.c.l.b16 %v312
        %v545 = vunpack.c.l.b16 %v313
        %v546 = vunpack.c.l.b16 %v314
        %v547 = vpack.c.b16 %v539, %v538
        %v548 = vpack.c.b16 %v541, %v540
        %v549 = vpack.c.b16 %v543, %v542
        %v550 = vpack.c.b16 %v545, %v544
        %v551 = vpack.c.b16 %v546, %v546
        %v553 = vsel %vm338, %v547, 0
        %v556 = vsel %vm338, %v548, 0
        %v559 = vsel %vm338, %v549, 0
        %v562 = vsel %vm338, %v550, 0
        %v565 = vsel %vm338, %v551, 0
        %567 = vmatprep.subr.bf16.mxu0 %v446
        %568 = vmatpush1.bf16.msra.mxu0 %v443
        %569 = vmatprep.subr.bf16.mxu0 0
        %570 = vmatpush1.bf16.msra.mxu0 0
        %571 = vmatprep.subr.bf16.mxu0 0
        %572 = vmatpush1.bf16.msra.mxu0 0
        %573 = vmatprep.subr.bf16.mxu0 0
        %574 = vmatpush1.bf16.msra.mxu0 0
        %575 = vmatprep.subr.bf16.mxu0 0
        %576 = vmatpush1.bf16.msra.mxu0 0
        %577 = vmatprep.subr.bf16.mxu0 0
        %578 = vmatpush1.bf16.msra.mxu0 0
        %579 = vmatprep.subr.bf16.mxu0 0
        %580 = vmatpush1.bf16.msra.mxu0 0
        %581 = vmatprep.subr.bf16.mxu0 0
        %582 = vmatpush1.bf16.msra.mxu0 0
        %583 = vmatprep.subr.bf16.mxu0 0
        %584 = vmatpush1.bf16.msra.mxu0 0
        %585 = vmatprep.subr.bf16.mxu0 0
        %586 = vmatpush1.bf16.msra.mxu0 0
        %587 = vmatprep.subr.bf16.mxu0 0
        %588 = vmatpush1.bf16.msra.mxu0 0
        %589 = vmatprep.subr.bf16.mxu0 0
        %590 = vmatpush1.bf16.msra.mxu0 0
        %591 = vmatprep.subr.bf16.mxu0 0
        %592 = vmatpush1.bf16.msra.mxu0 0
        %593 = vmatprep.subr.bf16.mxu0 0
        %594 = vmatpush1.bf16.msra.mxu0 0
        %595 = vmatprep.subr.bf16.mxu0 0
        %596 = vmatpush1.bf16.msra.mxu0 0
        %597 = vmatprep.subr.bf16.mxu0 0
        %598 = vmatpush1.bf16.msra.mxu0 0
        %599 = vmatprep.mubr.bf16.mxu0 0
        %600 = vmatmul.mubr.bf16.gmra.mrb[0].mxu0 %v553
        %v601 = vpop.f32.mrb[0].mxu0
        %v602 = vadd.f32 0.0, %v601
        %v603 = vpop.f32.mrb[0].mxu0
        %v604 = vadd.f32 0.0, %v603
        %v605 = vpop.f32.mrb[0].mxu0
        %v606 = vadd.f32 0.0, %v605
        %v607 = vpop.f32.mrb[0].mxu0
        %v608 = vadd.f32 0.0, %v607
        %609 = vmatprep.mubr.bf16.mxu0 0
        %610 = vmatmul.mubr.bf16.gmra.mrb[0].mxu0 %v556
        %v611 = vpop.f32.mrb[0].mxu0
        %v612 = vadd.f32 0.0, %v611
        %v613 = vpop.f32.mrb[0].mxu0
        %v614 = vadd.f32 0.0, %v613
        %v615 = vpop.f32.mrb[0].mxu0
        %v616 = vadd.f32 0.0, %v615
        %v617 = vpop.f32.mrb[0].mxu0
        %v618 = vadd.f32 0.0, %v617
        %619 = vmatprep.mubr.bf16.mxu0 0
        %620 = vmatmul.mubr.bf16.gmra.mrb[0].mxu0 %v559
        %v621 = vpop.f32.mrb[0].mxu0
        %v622 = vadd.f32 0.0, %v621
        %v623 = vpop.f32.mrb[0].mxu0
        %v624 = vadd.f32 0.0, %v623
        %v625 = vpop.f32.mrb[0].mxu0
        %v626 = vadd.f32 0.0, %v625
        %v627 = vpop.f32.mrb[0].mxu0
        %v628 = vadd.f32 0.0, %v627
        %629 = vmatprep.mubr.bf16.mxu0 0
        %630 = vmatmul.mubr.bf16.gmra.mrb[0].mxu0 %v562
        %v631 = vpop.f32.mrb[0].mxu0
        %v632 = vadd.f32 0.0, %v631
        %v633 = vpop.f32.mrb[0].mxu0
        %v634 = vadd.f32 0.0, %v633
        %v635 = vpop.f32.mrb[0].mxu0
        %v636 = vadd.f32 0.0, %v635
        %v637 = vpop.f32.mrb[0].mxu0
        %v638 = vadd.f32 0.0, %v637
        %639 = vmatprep.mubr.bf16.mxu0 0
        %640 = vmatmul.mubr.bf16.gmra.mrb[0].mxu0 %v565
        %v641 = vpop.f32.mrb[0].mxu0
        %v642 = vadd.f32 0.0, %v641
        %v643 = vpop.f32.mrb[0].mxu0
        %v644 = vadd.f32 0.0, %v643
        %v645 = vpop.f32.mrb[0].mxu0
        %v646 = vpop.f32.mrb[0].mxu0
        %647 = vdwg.mxu0
        %v648 = vadd.f32 %v483, %v602
        %v649 = vadd.f32 %v485, %v604
        %v650 = vadd.f32 %v487, %v606
        %v651 = vadd.f32 %v489, %v608
        %v652 = vadd.f32 %v493, %v612
        %v653 = vadd.f32 %v495, %v614
        %v654 = vadd.f32 %v497, %v616
        %v655 = vadd.f32 %v499, %v618
        %v656 = vadd.f32 %v503, %v622
        %v657 = vadd.f32 %v505, %v624
        %v658 = vadd.f32 %v507, %v626
        %v659 = vadd.f32 %v509, %v628
        %v660 = vadd.f32 %v513, %v632
        %v661 = vadd.f32 %v515, %v634
        %v662 = vadd.f32 %v517, %v636
        %v663 = vadd.f32 %v519, %v638
        %v664 = vadd.f32 %v523, %v642
        %v665 = vadd.f32 %v525, %v644
        %666 = vrot.lane.b32.xlu0 %v648, 102
        %v667 = vpop.permute.xlu0 %666
        %668 = vrot.lane.b32.xlu0 %v649, 102
        %v669 = vpop.permute.xlu0 %668
        %v670 = vlaneseq
        %v671 = vand.u32 %v670, 127
        %vm672 = vcmp.lt.s32.totalorder %v671, 102
        %v673 = vsel %vm672, %v667, %v669
        %v674 = vsel %vm672, %v669, %v667
        %vm675 = vcmp.ge.s32.totalorder %v294, 6
        %vm676 = vcmp.lt.s32.totalorder %v294, 22
        %vm677 = vmand %vm675, %vm676
        %vm678 = vcmp.ge.s32.totalorder %v296, 6
        %vm679 = vmand %vm677, %vm678
        %vm680 = vcmp.lt.s32.totalorder %v296, 22
        %vm681 = vmand %vm679, %vm680
        %v682 = vsel %vm681, 1, 0
        %v683 = vcvt.s32.f32 %v682
        %v685 = vlaneseq
        %v686 = vshrl.u32 %v685, 7
        %v687 = vsub.s32 0, %v686
        %v688 = vrot.slane %v683, %v687
        %v689 = vlaneseq
        %v690 = vshrl.u32 %v689, 7
        %v691 = vsub.s32 1, %v690
        %v692 = vrot.slane %v683, %v691
        %v695 = vmul.f32 %v674, %v688
        %v696 = vmul.f32 %v673, %v692
        %697 = vrot.lane.b32.xlu0 %v650, 96
        %v698 = vpop.permute.xlu0 %697
        %699 = vrot.lane.b32.xlu0 %v651, 96
        %v700 = vpop.permute.xlu0 %699
        %vm701 = vcmp.lt.s32.totalorder %v671, 96
        %v702 = vsel %vm701, %v698, %v700
        %v703 = vsel %vm701, %v700, %v698
        %vm704 = vcmp.ge.s32.totalorder %v296, 0
        %vm705 = vmand %vm677, %vm704
        %vm706 = vcmp.lt.s32.totalorder %v296, 16
        %vm707 = vmand %vm705, %vm706
        %v708 = vsel %vm707, 1, 0
        %v709 = vcvt.s32.f32 %v708
        %v711 = vlaneseq
        %v712 = vshrl.u32 %v711, 7
        %v713 = vsub.s32 0, %v712
        %v714 = vrot.slane %v709, %v713
        %v715 = vlaneseq
        %v716 = vshrl.u32 %v715, 7
        %v717 = vsub.s32 1, %v716
        %v718 = vrot.slane %v709, %v717
        %v721 = vmul.f32 %v703, %v714
        %v722 = vmul.f32 %v702, %v718
        %v723 = vadd.f32 %v695, %v721
        %v724 = vadd.f32 %v696, %v722
        %725 = vrot.lane.b32.xlu0 %v652, 90
        %v726 = vpop.permute.xlu0 %725
        %727 = vrot.lane.b32.xlu0 %v653, 90
        %v728 = vpop.permute.xlu0 %727
        %vm729 = vcmp.lt.s32.totalorder %v671, 90
        %v730 = vsel %vm729, %v726, %v728
        %v731 = vsel %vm729, %v728, %v726
        %vm732 = vcmp.ge.s32.totalorder %v296, 4294967290
        %vm733 = vmand %vm677, %vm732
        %vm734 = vcmp.lt.s32.totalorder %v296, 10
        %vm735 = vmand %vm733, %vm734
        %v736 = vsel %vm735, 1, 0
        %v737 = vcvt.s32.f32 %v736
        %v739 = vlaneseq
        %v740 = vshrl.u32 %v739, 7
        %v741 = vsub.s32 0, %v740
        %v742 = vrot.slane %v737, %v741
        %v743 = vlaneseq
        %v744 = vshrl.u32 %v743, 7
        %v745 = vsub.s32 1, %v744
        %v746 = vrot.slane %v737, %v745
        %v749 = vmul.f32 %v731, %v742
        %v750 = vmul.f32 %v730, %v746
        %v751 = vadd.f32 %v723, %v749
        %v752 = vadd.f32 %v724, %v750
        %753 = vrot.lane.b32.xlu0 %v654, 6
        %v754 = vpop.permute.xlu0 %753
        %755 = vrot.lane.b32.xlu0 %v655, 6
        %v756 = vpop.permute.xlu0 %755
        %vm757 = vcmp.lt.s32.totalorder %v671, 6
        %v758 = vsel %vm757, %v754, %v756
        %v759 = vsel %vm757, %v756, %v754
        %vm760 = vcmp.ge.s32.totalorder %v294, 0
        %vm761 = vcmp.lt.s32.totalorder %v294, 16
        %vm762 = vmand %vm760, %vm761
        %vm763 = vmand %vm762, %vm678
        %vm764 = vmand %vm763, %vm680
        %v765 = vsel %vm764, 1, 0
        %v766 = vcvt.s32.f32 %v765
        %v768 = vlaneseq
        %v769 = vshrl.u32 %v768, 7
        %v770 = vsub.s32 0, %v769
        %v771 = vrot.slane %v766, %v770
        %v772 = vlaneseq
        %v773 = vshrl.u32 %v772, 7
        %v774 = vsub.s32 1, %v773
        %v775 = vrot.slane %v766, %v774
        %v778 = vmul.f32 %v759, %v771
        %v779 = vmul.f32 %v758, %v775
        %v780 = vadd.f32 %v751, %v778
        %v781 = vadd.f32 %v752, %v779
        %vm782 = vmand %vm762, %vm704
        %vm783 = vmand %vm782, %vm706
        %v784 = vsel %vm783, 1, 0
        %v785 = vcvt.s32.f32 %v784
        %v787 = vlaneseq
        %v788 = vshrl.u32 %v787, 7
        %v789 = vsub.s32 0, %v788
        %v790 = vrot.slane %v785, %v789
        %v791 = vlaneseq
        %v792 = vshrl.u32 %v791, 7
        %v793 = vsub.s32 1, %v792
        %v794 = vrot.slane %v785, %v793
        %v797 = vmul.f32 %v656, %v790
        %v798 = vmul.f32 %v657, %v794
        %v799 = vadd.f32 %v780, %v797
        %v800 = vadd.f32 %v781, %v798
        %801 = vrot.lane.b32.xlu0 %v658, 122
        %v802 = vpop.permute.xlu0 %801
        %803 = vrot.lane.b32.xlu0 %v659, 122
        %v804 = vpop.permute.xlu0 %803
        %vm805 = vcmp.lt.s32.totalorder %v671, 122
        %v806 = vsel %vm805, %v802, %v804
        %v807 = vsel %vm805, %v804, %v802
        %vm808 = vmand %vm762, %vm732
        %vm809 = vmand %vm808, %vm734
        %v810 = vsel %vm809, 1, 0
        %v811 = vcvt.s32.f32 %v810
        %v813 = vlaneseq
        %v814 = vshrl.u32 %v813, 7
        %v815 = vsub.s32 0, %v814
        %v816 = vrot.slane %v811, %v815
        %v817 = vlaneseq
        %v818 = vshrl.u32 %v817, 7
        %v819 = vsub.s32 1, %v818
        %v820 = vrot.slane %v811, %v819
        %v823 = vmul.f32 %v806, %v816
        %v824 = vmul.f32 %v807, %v820
        %v825 = vadd.f32 %v799, %v823
        %v826 = vadd.f32 %v800, %v824
        %827 = vrot.lane.b32.xlu0 %v660, 38
        %v828 = vpop.permute.xlu0 %827
        %829 = vrot.lane.b32.xlu0 %v661, 38
        %v830 = vpop.permute.xlu0 %829
        %vm831 = vcmp.lt.s32.totalorder %v671, 38
        %v832 = vsel %vm831, %v828, %v830
        %v833 = vsel %vm831, %v830, %v828
        %vm834 = vcmp.ge.s32.totalorder %v294, 4294967290
        %vm835 = vcmp.lt.s32.totalorder %v294, 10
        %vm836 = vmand %vm834, %vm835
        %vm837 = vmand %vm836, %vm678
        %vm838 = vmand %vm837, %vm680
        %v839 = vsel %vm838, 1, 0
        %v840 = vcvt.s32.f32 %v839
        %v842 = vlaneseq
        %v843 = vshrl.u32 %v842, 7
        %v844 = vsub.s32 0, %v843
        %v845 = vrot.slane %v840, %v844
        %v846 = vlaneseq
        %v847 = vshrl.u32 %v846, 7
        %v848 = vsub.s32 1, %v847
        %v849 = vrot.slane %v840, %v848
        %v852 = vmul.f32 %v832, %v845
        %v853 = vmul.f32 %v833, %v849
        %v854 = vadd.f32 %v825, %v852
        %v855 = vadd.f32 %v826, %v853
        %856 = vrot.lane.b32.xlu0 %v662, 32
        %v857 = vpop.permute.xlu0 %856
        %858 = vrot.lane.b32.xlu0 %v663, 32
        %v859 = vpop.permute.xlu0 %858
        %vm860 = vcmp.lt.s32.totalorder %v671, 32
        %v861 = vsel %vm860, %v857, %v859
        %v862 = vsel %vm860, %v859, %v857
        %vm863 = vmand %vm836, %vm704
        %vm864 = vmand %vm863, %vm706
        %v865 = vsel %vm864, 1, 0
        %v866 = vcvt.s32.f32 %v865
        %v868 = vlaneseq
        %v869 = vshrl.u32 %v868, 7
        %v870 = vsub.s32 0, %v869
        %v871 = vrot.slane %v866, %v870
        %v872 = vlaneseq
        %v873 = vshrl.u32 %v872, 7
        %v874 = vsub.s32 1, %v873
        %v875 = vrot.slane %v866, %v874
        %v878 = vmul.f32 %v861, %v871
        %v879 = vmul.f32 %v862, %v875
        %v880 = vadd.f32 %v854, %v878
        %v881 = vadd.f32 %v855, %v879
        %882 = vrot.lane.b32.xlu0 %v664, 26
        %v883 = vpop.permute.xlu0 %882
        %884 = vrot.lane.b32.xlu0 %v665, 26
        %v885 = vpop.permute.xlu0 %884
        %vm886 = vcmp.lt.s32.totalorder %v671, 26
        %v887 = vsel %vm886, %v883, %v885
        %v888 = vsel %vm886, %v885, %v883
        %vm889 = vmand %vm836, %vm732
        %vm890 = vmand %vm889, %vm734
        %v891 = vsel %vm890, 1, 0
        %v892 = vcvt.s32.f32 %v891
        %v894 = vlaneseq
        %v895 = vshrl.u32 %v894, 7
        %v896 = vsub.s32 0, %v895
        %v897 = vrot.slane %v892, %v896
        %v898 = vlaneseq
        %v899 = vshrl.u32 %v898, 7
        %v900 = vsub.s32 1, %v899
        %v901 = vrot.slane %v892, %v900
        %v904 = vmul.f32 %v887, %v897
        %v905 = vmul.f32 %v888, %v901
        %v906 = vadd.f32 %v880, %v904
        %v907 = vadd.f32 %v881, %v905
        %s908 = scalar_lea.vmem %s278, 36
        %v909 = vld [vmem:[%s908] sm:$0xf]
        %v910 = vld [vmem:[%s908 + $0x4] sm:$0xf]
        %v911 = vld [vmem:[%s908 + $0x8] sm:$0xf]
        %v912 = vld [vmem:[%s908 + $0xc] sm:$0xf]
        %v913 = vld [vmem:[%s908 + $0x10] sm:$0xf]
        %v914 = vld [vmem:[%s908 + $0x14] sm:$0xf]
        %v915 = vld [vmem:[%s908 + $0x18] sm:$0xf]
        %v916 = vld [vmem:[%s908 + $0x1c] sm:$0xf]
        %v917 = vld [vmem:[%s908 + $0x20] sm:$0xf]
        %s918 = scalar_lea.vmem %s282, 36
        %v919 = vld [vmem:[%s918] sm:$0xf]
        %v920 = vld [vmem:[%s918 + $0x4] sm:$0xf]
        %v921 = vld [vmem:[%s918 + $0x8] sm:$0xf]
        %v922 = vld [vmem:[%s918 + $0xc] sm:$0xf]
        %v923 = vld [vmem:[%s918 + $0x10] sm:$0xf]
        %v924 = vld [vmem:[%s918 + $0x14] sm:$0xf]
        %v925 = vld [vmem:[%s918 + $0x18] sm:$0xf]
        %v926 = vld [vmem:[%s918 + $0x1c] sm:$0xf]
        %v927 = vld [vmem:[%s918 + $0x20] sm:$0xf]
        %v937 = vunpack.c.l.b16 %v909
        %v938 = vunpack.c.l.b16 %v910
        %v939 = vunpack.c.l.b16 %v911
        %v940 = vunpack.c.l.b16 %v912
        %v941 = vunpack.c.l.b16 %v913
        %v942 = vunpack.c.l.b16 %v914
        %v943 = vunpack.c.l.b16 %v915
        %v944 = vunpack.c.l.b16 %v916
        %v945 = vunpack.c.l.b16 %v917
        %v946 = vpack.c.b16 %v938, %v937
        %v947 = vpack.c.b16 %v940, %v939
        %v948 = vpack.c.b16 %v942, %v941
        %v949 = vpack.c.b16 %v944, %v943
        %v950 = vpack.c.b16 %v945, %v945
        %v952 = vsel %vm338, %v946, 0
        %v955 = vsel %vm338, %v947, 0
        %v958 = vsel %vm338, %v948, 0
        %v961 = vsel %vm338, %v949, 0
        %v964 = vsel %vm338, %v950, 0
        %966 = vmatprep.subr.bf16.mxu0 %v359
        %967 = vmatpush1.bf16.msra.mxu0 %v356
        %968 = vmatprep.subr.bf16.mxu0 0
        %969 = vmatpush1.bf16.msra.mxu0 0
        %970 = vmatprep.subr.bf16.mxu0 0
        %971 = vmatpush1.bf16.msra.mxu0 0
        %972 = vmatprep.subr.bf16.mxu0 0
        %973 = vmatpush1.bf16.msra.mxu0 0
        %974 = vmatprep.subr.bf16.mxu0 0
        %975 = vmatpush1.bf16.msra.mxu0 0
        %976 = vmatprep.subr.bf16.mxu0 0
        %977 = vmatpush1.bf16.msra.mxu0 0
        %978 = vmatprep.subr.bf16.mxu0 0
        %979 = vmatpush1.bf16.msra.mxu0 0
        %980 = vmatprep.subr.bf16.mxu0 0
        %981 = vmatpush1.bf16.msra.mxu0 0
        %982 = vmatprep.subr.bf16.mxu0 0
        %983 = vmatpush1.bf16.msra.mxu0 0
        %984 = vmatprep.subr.bf16.mxu0 0
        %985 = vmatpush1.bf16.msra.mxu0 0
        %986 = vmatprep.subr.bf16.mxu0 0
        %987 = vmatpush1.bf16.msra.mxu0 0
        %988 = vmatprep.subr.bf16.mxu0 0
        %989 = vmatpush1.bf16.msra.mxu0 0
        %990 = vmatprep.subr.bf16.mxu0 0
        %991 = vmatpush1.bf16.msra.mxu0 0
        %992 = vmatprep.subr.bf16.mxu0 0
        %993 = vmatpush1.bf16.msra.mxu0 0
        %994 = vmatprep.subr.bf16.mxu0 0
        %995 = vmatpush1.bf16.msra.mxu0 0
        %996 = vmatprep.subr.bf16.mxu0 0
        %997 = vmatpush1.bf16.msra.mxu0 0
        %998 = vmatprep.mubr.bf16.mxu0 0
        %999 = vmatmul.mubr.bf16.gmra.mrb[0].mxu0 %v952
        %v1000 = vpop.f32.mrb[0].mxu0
        %v1001 = vadd.f32 0.0, %v1000
        %v1002 = vpop.f32.mrb[0].mxu0
        %v1003 = vadd.f32 0.0, %v1002
        %v1004 = vpop.f32.mrb[0].mxu0
        %v1005 = vadd.f32 0.0, %v1004
        %v1006 = vpop.f32.mrb[0].mxu0
        %v1007 = vadd.f32 0.0, %v1006
        %1008 = vmatprep.mubr.bf16.mxu0 0
        %1009 = vmatmul.mubr.bf16.gmra.mrb[0].mxu0 %v955
        %v1010 = vpop.f32.mrb[0].mxu0
        %v1011 = vadd.f32 0.0, %v1010
        %v1012 = vpop.f32.mrb[0].mxu0
        %v1013 = vadd.f32 0.0, %v1012
        %v1014 = vpop.f32.mrb[0].mxu0
        %v1015 = vadd.f32 0.0, %v1014
        %v1016 = vpop.f32.mrb[0].mxu0
        %v1017 = vadd.f32 0.0, %v1016
        %1018 = vmatprep.mubr.bf16.mxu0 0
        %1019 = vmatmul.mubr.bf16.gmra.mrb[0].mxu0 %v958
        %v1020 = vpop.f32.mrb[0].mxu0
        %v1021 = vadd.f32 0.0, %v1020
        %v1022 = vpop.f32.mrb[0].mxu0
        %v1023 = vadd.f32 0.0, %v1022
        %v1024 = vpop.f32.mrb[0].mxu0
        %v1025 = vadd.f32 0.0, %v1024
        %v1026 = vpop.f32.mrb[0].mxu0
        %v1027 = vadd.f32 0.0, %v1026
        %1028 = vmatprep.mubr.bf16.mxu0 0
        %1029 = vmatmul.mubr.bf16.gmra.mrb[0].mxu0 %v961
        %v1030 = vpop.f32.mrb[0].mxu0
        %v1031 = vadd.f32 0.0, %v1030
        %v1032 = vpop.f32.mrb[0].mxu0
        %v1033 = vadd.f32 0.0, %v1032
        %v1034 = vpop.f32.mrb[0].mxu0
        %v1035 = vadd.f32 0.0, %v1034
        %v1036 = vpop.f32.mrb[0].mxu0
        %v1037 = vadd.f32 0.0, %v1036
        %1038 = vmatprep.mubr.bf16.mxu0 0
        %1039 = vmatmul.mubr.bf16.gmra.mrb[0].mxu0 %v964
        %v1040 = vpop.f32.mrb[0].mxu0
        %v1041 = vadd.f32 0.0, %v1040
        %v1042 = vpop.f32.mrb[0].mxu0
        %v1043 = vadd.f32 0.0, %v1042
        %v1044 = vpop.f32.mrb[0].mxu0
        %v1045 = vpop.f32.mrb[0].mxu0
        %1046 = vdwg.mxu0
        %1047 = vmatprep.subr.bf16.mxu0 %v446
        %1048 = vmatpush1.bf16.msra.mxu0 %v443
        %1049 = vmatprep.subr.bf16.mxu0 0
        %1050 = vmatpush1.bf16.msra.mxu0 0
        %1051 = vmatprep.subr.bf16.mxu0 0
        %1052 = vmatpush1.bf16.msra.mxu0 0
        %1053 = vmatprep.subr.bf16.mxu0 0
        %1054 = vmatpush1.bf16.msra.mxu0 0
        %1055 = vmatprep.subr.bf16.mxu0 0
        %1056 = vmatpush1.bf16.msra.mxu0 0
        %1057 = vmatprep.subr.bf16.mxu0 0
        %1058 = vmatpush1.bf16.msra.mxu0 0
        %1059 = vmatprep.subr.bf16.mxu0 0
        %1060 = vmatpush1.bf16.msra.mxu0 0
        %1061 = vmatprep.subr.bf16.mxu0 0
        %1062 = vmatpush1.bf16.msra.mxu0 0
        %1063 = vmatprep.subr.bf16.mxu0 0
        %1064 = vmatpush1.bf16.msra.mxu0 0
        %1065 = vmatprep.subr.bf16.mxu0 0
        %1066 = vmatpush1.bf16.msra.mxu0 0
        %1067 = vmatprep.subr.bf16.mxu0 0
        %1068 = vmatpush1.bf16.msra.mxu0 0
        %1069 = vmatprep.subr.bf16.mxu0 0
        %1070 = vmatpush1.bf16.msra.mxu0 0
        %1071 = vmatprep.subr.bf16.mxu0 0
        %1072 = vmatpush1.bf16.msra.mxu0 0
        %1073 = vmatprep.subr.bf16.mxu0 0
        %1074 = vmatpush1.bf16.msra.mxu0 0
        %1075 = vmatprep.subr.bf16.mxu0 0
        %1076 = vmatpush1.bf16.msra.mxu0 0
        %1077 = vmatprep.subr.bf16.mxu0 0
        %1078 = vmatpush1.bf16.msra.mxu0 0
        %1079 = vmatprep.mubr.bf16.mxu0 0
        %1080 = vmatmul.mubr.bf16.gmra.mrb[0].mxu0 %v952
        %v1081 = vpop.f32.mrb[0].mxu0
        %v1082 = vadd.f32 %v1001, %v1081
        %v1083 = vpop.f32.mrb[0].mxu0
        %v1084 = vadd.f32 %v1003, %v1083
        %v1085 = vpop.f32.mrb[0].mxu0
        %v1086 = vadd.f32 %v1005, %v1085
        %v1087 = vpop.f32.mrb[0].mxu0
        %v1088 = vadd.f32 %v1007, %v1087
        %1089 = vmatprep.mubr.bf16.mxu0 0
        %1090 = vmatmul.mubr.bf16.gmra.mrb[0].mxu0 %v955
        %v1091 = vpop.f32.mrb[0].mxu0
        %v1092 = vadd.f32 %v1011, %v1091
        %v1093 = vpop.f32.mrb[0].mxu0
        %v1094 = vadd.f32 %v1013, %v1093
        %v1095 = vpop.f32.mrb[0].mxu0
        %v1096 = vadd.f32 %v1015, %v1095
        %v1097 = vpop.f32.mrb[0].mxu0
        %v1098 = vadd.f32 %v1017, %v1097
        %1099 = vmatprep.mubr.bf16.mxu0 0
        %1100 = vmatmul.mubr.bf16.gmra.mrb[0].mxu0 %v958
        %v1101 = vpop.f32.mrb[0].mxu0
        %v1102 = vadd.f32 %v1021, %v1101
        %v1103 = vpop.f32.mrb[0].mxu0
        %v1104 = vadd.f32 %v1023, %v1103
        %v1105 = vpop.f32.mrb[0].mxu0
        %v1106 = vadd.f32 %v1025, %v1105
        %v1107 = vpop.f32.mrb[0].mxu0
        %v1108 = vadd.f32 %v1027, %v1107
        %1109 = vmatprep.mubr.bf16.mxu0 0
        %1110 = vmatmul.mubr.bf16.gmra.mrb[0].mxu0 %v961
        %v1111 = vpop.f32.mrb[0].mxu0
        %v1112 = vadd.f32 %v1031, %v1111
        %v1113 = vpop.f32.mrb[0].mxu0
        %v1114 = vadd.f32 %v1033, %v1113
        %v1115 = vpop.f32.mrb[0].mxu0
        %v1116 = vadd.f32 %v1035, %v1115
        %v1117 = vpop.f32.mrb[0].mxu0
        %v1118 = vadd.f32 %v1037, %v1117
        %1119 = vmatprep.mubr.bf16.mxu0 0
        %1120 = vmatmul.mubr.bf16.gmra.mrb[0].mxu0 %v964
        %v1121 = vpop.f32.mrb[0].mxu0
        %v1122 = vadd.f32 %v1041, %v1121
        %v1123 = vpop.f32.mrb[0].mxu0
        %v1124 = vadd.f32 %v1043, %v1123
        %v1125 = vpop.f32.mrb[0].mxu0
        %v1126 = vpop.f32.mrb[0].mxu0
        %1127 = vdwg.mxu0
        %v1137 = vunpack.c.l.b16 %v919
        %v1138 = vunpack.c.l.b16 %v920
        %v1139 = vunpack.c.l.b16 %v921
        %v1140 = vunpack.c.l.b16 %v922
        %v1141 = vunpack.c.l.b16 %v923
        %v1142 = vunpack.c.l.b16 %v924
        %v1143 = vunpack.c.l.b16 %v925
        %v1144 = vunpack.c.l.b16 %v926
        %v1145 = vunpack.c.l.b16 %v927
        %v1146 = vpack.c.b16 %v1138, %v1137
        %v1147 = vpack.c.b16 %v1140, %v1139
        %v1148 = vpack.c.b16 %v1142, %v1141
        %v1149 = vpack.c.b16 %v1144, %v1143
        %v1150 = vpack.c.b16 %v1145, %v1145
        %v1152 = vsel %vm338, %v1146, 0
        %v1155 = vsel %vm338, %v1147, 0
        %v1158 = vsel %vm338, %v1148, 0
        %v1161 = vsel %vm338, %v1149, 0
        %v1164 = vsel %vm338, %v1150, 0
        %1166 = vmatprep.subr.bf16.mxu0 %v446
        %1167 = vmatpush1.bf16.msra.mxu0 %v443
        %1168 = vmatprep.subr.bf16.mxu0 0
        %1169 = vmatpush1.bf16.msra.mxu0 0
        %1170 = vmatprep.subr.bf16.mxu0 0
        %1171 = vmatpush1.bf16.msra.mxu0 0
        %1172 = vmatprep.subr.bf16.mxu0 0
        %1173 = vmatpush1.bf16.msra.mxu0 0
        %1174 = vmatprep.subr.bf16.mxu0 0
        %1175 = vmatpush1.bf16.msra.mxu0 0
        %1176 = vmatprep.subr.bf16.mxu0 0
        %1177 = vmatpush1.bf16.msra.mxu0 0
        %1178 = vmatprep.subr.bf16.mxu0 0
        %1179 = vmatpush1.bf16.msra.mxu0 0
        %1180 = vmatprep.subr.bf16.mxu0 0
        %1181 = vmatpush1.bf16.msra.mxu0 0
        %1182 = vmatprep.subr.bf16.mxu0 0
        %1183 = vmatpush1.bf16.msra.mxu0 0
        %1184 = vmatprep.subr.bf16.mxu0 0
        %1185 = vmatpush1.bf16.msra.mxu0 0
        %1186 = vmatprep.subr.bf16.mxu0 0
        %1187 = vmatpush1.bf16.msra.mxu0 0
        %1188 = vmatprep.subr.bf16.mxu0 0
        %1189 = vmatpush1.bf16.msra.mxu0 0
        %1190 = vmatprep.subr.bf16.mxu0 0
        %1191 = vmatpush1.bf16.msra.mxu0 0
        %1192 = vmatprep.subr.bf16.mxu0 0
        %1193 = vmatpush1.bf16.msra.mxu0 0
        %1194 = vmatprep.subr.bf16.mxu0 0
        %1195 = vmatpush1.bf16.msra.mxu0 0
        %1196 = vmatprep.subr.bf16.mxu0 0
        %1197 = vmatpush1.bf16.msra.mxu0 0
        %1198 = vmatprep.mubr.bf16.mxu0 0
        %1199 = vmatmul.mubr.bf16.gmra.mrb[0].mxu0 %v1152
        %v1200 = vpop.f32.mrb[0].mxu0
        %v1201 = vadd.f32 0.0, %v1200
        %v1202 = vpop.f32.mrb[0].mxu0
        %v1203 = vadd.f32 0.0, %v1202
        %v1204 = vpop.f32.mrb[0].mxu0
        %v1205 = vadd.f32 0.0, %v1204
        %v1206 = vpop.f32.mrb[0].mxu0
        %v1207 = vadd.f32 0.0, %v1206
        %1208 = vmatprep.mubr.bf16.mxu0 0
        %1209 = vmatmul.mubr.bf16.gmra.mrb[0].mxu0 %v1155
        %v1210 = vpop.f32.mrb[0].mxu0
        %v1211 = vadd.f32 0.0, %v1210
        %v1212 = vpop.f32.mrb[0].mxu0
        %v1213 = vadd.f32 0.0, %v1212
        %v1214 = vpop.f32.mrb[0].mxu0
        %v1215 = vadd.f32 0.0, %v1214
        %v1216 = vpop.f32.mrb[0].mxu0
        %v1217 = vadd.f32 0.0, %v1216
        %1218 = vmatprep.mubr.bf16.mxu0 0
        %1219 = vmatmul.mubr.bf16.gmra.mrb[0].mxu0 %v1158
        %v1220 = vpop.f32.mrb[0].mxu0
        %v1221 = vadd.f32 0.0, %v1220
        %v1222 = vpop.f32.mrb[0].mxu0
        %v1223 = vadd.f32 0.0, %v1222
        %v1224 = vpop.f32.mrb[0].mxu0
        %v1225 = vadd.f32 0.0, %v1224
        %v1226 = vpop.f32.mrb[0].mxu0
        %v1227 = vadd.f32 0.0, %v1226
        %1228 = vmatprep.mubr.bf16.mxu0 0
        %1229 = vmatmul.mubr.bf16.gmra.mrb[0].mxu0 %v1161
        %v1230 = vpop.f32.mrb[0].mxu0
        %v1231 = vadd.f32 0.0, %v1230
        %v1232 = vpop.f32.mrb[0].mxu0
        %v1233 = vadd.f32 0.0, %v1232
        %v1234 = vpop.f32.mrb[0].mxu0
        %v1235 = vadd.f32 0.0, %v1234
        %v1236 = vpop.f32.mrb[0].mxu0
        %v1237 = vadd.f32 0.0, %v1236
        %1238 = vmatprep.mubr.bf16.mxu0 0
        %1239 = vmatmul.mubr.bf16.gmra.mrb[0].mxu0 %v1164
        %v1240 = vpop.f32.mrb[0].mxu0
        %v1241 = vadd.f32 0.0, %v1240
        %v1242 = vpop.f32.mrb[0].mxu0
        %v1243 = vadd.f32 0.0, %v1242
        %v1244 = vpop.f32.mrb[0].mxu0
        %v1245 = vpop.f32.mrb[0].mxu0
        %1246 = vdwg.mxu0
        %v1247 = vadd.f32 %v1082, %v1201
        %v1248 = vadd.f32 %v1084, %v1203
        %v1249 = vadd.f32 %v1086, %v1205
        %v1250 = vadd.f32 %v1088, %v1207
        %v1251 = vadd.f32 %v1092, %v1211
        %v1252 = vadd.f32 %v1094, %v1213
        %v1253 = vadd.f32 %v1096, %v1215
        %v1254 = vadd.f32 %v1098, %v1217
        %v1255 = vadd.f32 %v1102, %v1221
        %v1256 = vadd.f32 %v1104, %v1223
        %v1257 = vadd.f32 %v1106, %v1225
        %v1258 = vadd.f32 %v1108, %v1227
        %v1259 = vadd.f32 %v1112, %v1231
        %v1260 = vadd.f32 %v1114, %v1233
        %v1261 = vadd.f32 %v1116, %v1235
        %v1262 = vadd.f32 %v1118, %v1237
        %v1263 = vadd.f32 %v1122, %v1241
        %v1264 = vadd.f32 %v1124, %v1243
        %1265 = vrot.lane.b32.xlu0 %v1247, 76
        %v1266 = vpop.permute.xlu0 %1265
        %1267 = vrot.lane.b32.xlu0 %v1248, 76
        %v1268 = vpop.permute.xlu0 %1267
        %vm1269 = vcmp.lt.s32.totalorder %v671, 76
        %v1270 = vsel %vm1269, %v1266, %v1268
        %v1271 = vsel %vm1269, %v1268, %v1266
        %vm1272 = vcmp.ge.s32.totalorder %v294, 12
        %vm1273 = vcmp.lt.s32.totalorder %v294, 28
        %vm1274 = vmand %vm1272, %vm1273
        %vm1275 = vcmp.ge.s32.totalorder %v296, 12
        %vm1276 = vmand %vm1274, %vm1275
        %vm1277 = vcmp.lt.s32.totalorder %v296, 28
        %vm1278 = vmand %vm1276, %vm1277
        %v1279 = vsel %vm1278, 1, 0
        %v1280 = vcvt.s32.f32 %v1279
        %v1282 = vlaneseq
        %v1283 = vshrl.u32 %v1282, 7
        %v1284 = vsub.s32 0, %v1283
        %v1285 = vrot.slane %v1280, %v1284
        %v1286 = vlaneseq
        %v1287 = vshrl.u32 %v1286, 7
        %v1288 = vsub.s32 1, %v1287
        %v1289 = vrot.slane %v1280, %v1288
        %v1292 = vmul.f32 %v1270, %v1285
        %v1293 = vmul.f32 %v1271, %v1289
        %1294 = vrot.lane.b32.xlu0 %v1249, 64
        %v1295 = vpop.permute.xlu0 %1294
        %1296 = vrot.lane.b32.xlu0 %v1250, 64
        %v1297 = vpop.permute.xlu0 %1296
        %vm1298 = vcmp.lt.s32.totalorder %v671, 64
        %v1299 = vsel %vm1298, %v1295, %v1297
        %v1300 = vsel %vm1298, %v1297, %v1295
        %vm1301 = vmand %vm1274, %vm704
        %vm1302 = vmand %vm1301, %vm706
        %v1303 = vsel %vm1302, 1, 0
        %v1304 = vcvt.s32.f32 %v1303
        %v1306 = vlaneseq
        %v1307 = vshrl.u32 %v1306, 7
        %v1308 = vsub.s32 0, %v1307
        %v1309 = vrot.slane %v1304, %v1308
        %v1310 = vlaneseq
        %v1311 = vshrl.u32 %v1310, 7
        %v1312 = vsub.s32 1, %v1311
        %v1313 = vrot.slane %v1304, %v1312
        %v1316 = vmul.f32 %v1299, %v1309
        %v1317 = vmul.f32 %v1300, %v1313
        %v1318 = vadd.f32 %v1292, %v1316
        %v1319 = vadd.f32 %v1293, %v1317
        %1320 = vrot.lane.b32.xlu0 %v1251, 52
        %v1321 = vpop.permute.xlu0 %1320
        %1322 = vrot.lane.b32.xlu0 %v1252, 52
        %v1323 = vpop.permute.xlu0 %1322
        %vm1324 = vcmp.lt.s32.totalorder %v671, 52
        %v1325 = vsel %vm1324, %v1321, %v1323
        %v1326 = vsel %vm1324, %v1323, %v1321
        %vm1327 = vcmp.ge.s32.totalorder %v296, 4294967284
        %vm1328 = vmand %vm1274, %vm1327
        %vm1329 = vcmp.lt.s32.totalorder %v296, 4
        %vm1330 = vmand %vm1328, %vm1329
        %v1331 = vsel %vm1330, 1, 0
        %v1332 = vcvt.s32.f32 %v1331
        %v1334 = vlaneseq
        %v1335 = vshrl.u32 %v1334, 7
        %v1336 = vsub.s32 0, %v1335
        %v1337 = vrot.slane %v1332, %v1336
        %v1338 = vlaneseq
        %v1339 = vshrl.u32 %v1338, 7
        %v1340 = vsub.s32 1, %v1339
        %v1341 = vrot.slane %v1332, %v1340
        %v1344 = vmul.f32 %v1325, %v1337
        %v1345 = vmul.f32 %v1326, %v1341
        %v1346 = vadd.f32 %v1318, %v1344
        %v1347 = vadd.f32 %v1319, %v1345
        %1348 = vrot.lane.b32.xlu0 %v1253, 12
        %v1349 = vpop.permute.xlu0 %1348
        %1350 = vrot.lane.b32.xlu0 %v1254, 12
        %v1351 = vpop.permute.xlu0 %1350
        %vm1352 = vcmp.lt.s32.totalorder %v671, 12
        %v1353 = vsel %vm1352, %v1349, %v1351
        %v1354 = vsel %vm1352, %v1351, %v1349
        %vm1355 = vmand %vm762, %vm1275
        %vm1356 = vmand %vm1355, %vm1277
        %v1357 = vsel %vm1356, 1, 0
        %v1358 = vcvt.s32.f32 %v1357
        %v1360 = vlaneseq
        %v1361 = vshrl.u32 %v1360, 7
        %v1362 = vsub.s32 0, %v1361
        %v1363 = vrot.slane %v1358, %v1362
        %v1364 = vlaneseq
        %v1365 = vshrl.u32 %v1364, 7
        %v1366 = vsub.s32 1, %v1365
        %v1367 = vrot.slane %v1358, %v1366
        %v1370 = vmul.f32 %v1354, %v1363
        %v1371 = vmul.f32 %v1353, %v1367
        %v1372 = vadd.f32 %v1346, %v1370
        %v1373 = vadd.f32 %v1347, %v1371
        %v1374 = vmul.f32 %v1255, %v790
        %v1375 = vmul.f32 %v1256, %v794
        %v1376 = vadd.f32 %v1372, %v1374
        %v1377 = vadd.f32 %v1373, %v1375
        %1378 = vrot.lane.b32.xlu0 %v1257, 116
        %v1379 = vpop.permute.xlu0 %1378
        %1380 = vrot.lane.b32.xlu0 %v1258, 116
        %v1381 = vpop.permute.xlu0 %1380
        %vm1382 = vcmp.lt.s32.totalorder %v671, 116
        %v1383 = vsel %vm1382, %v1379, %v1381
        %v1384 = vsel %vm1382, %v1381, %v1379
        %vm1385 = vmand %vm762, %vm1327
        %vm1386 = vmand %vm1385, %vm1329
        %v1387 = vsel %vm1386, 1, 0
        %v1388 = vcvt.s32.f32 %v1387
        %v1390 = vlaneseq
        %v1391 = vshrl.u32 %v1390, 7
        %v1392 = vsub.s32 0, %v1391
        %v1393 = vrot.slane %v1388, %v1392
        %v1394 = vlaneseq
        %v1395 = vshrl.u32 %v1394, 7
        %v1396 = vsub.s32 1, %v1395
        %v1397 = vrot.slane %v1388, %v1396
        %v1400 = vmul.f32 %v1383, %v1393
        %v1401 = vmul.f32 %v1384, %v1397
        %v1402 = vadd.f32 %v1376, %v1400
        %v1403 = vadd.f32 %v1377, %v1401
        %1404 = vrot.lane.b32.xlu0 %v1259, 76
        %v1405 = vpop.permute.xlu0 %1404
        %1406 = vrot.lane.b32.xlu0 %v1260, 76
        %v1407 = vpop.permute.xlu0 %1406
        %v1408 = vsel %vm1269, %v1405, %v1407
        %v1409 = vsel %vm1269, %v1407, %v1405
        %vm1410 = vcmp.ge.s32.totalorder %v294, 4294967284
        %vm1411 = vcmp.lt.s32.totalorder %v294, 4
        %vm1412 = vmand %vm1410, %vm1411
        %vm1413 = vmand %vm1412, %vm1275
        %vm1414 = vmand %vm1413, %vm1277
        %v1415 = vsel %vm1414, 1, 0
        %v1416 = vcvt.s32.f32 %v1415
        %v1418 = vlaneseq
        %v1419 = vshrl.u32 %v1418, 7
        %v1420 = vsub.s32 0, %v1419
        %v1421 = vrot.slane %v1416, %v1420
        %v1422 = vlaneseq
        %v1423 = vshrl.u32 %v1422, 7
        %v1424 = vsub.s32 1, %v1423
        %v1425 = vrot.slane %v1416, %v1424
        %v1428 = vmul.f32 %v1409, %v1421
        %v1429 = vmul.f32 %v1408, %v1425
        %v1430 = vadd.f32 %v1402, %v1428
        %v1431 = vadd.f32 %v1403, %v1429
        %1432 = vrot.lane.b32.xlu0 %v1261, 64
        %v1433 = vpop.permute.xlu0 %1432
        %1434 = vrot.lane.b32.xlu0 %v1262, 64
        %v1435 = vpop.permute.xlu0 %1434
        %v1436 = vsel %vm1298, %v1433, %v1435
        %v1437 = vsel %vm1298, %v1435, %v1433
        %vm1438 = vmand %vm1412, %vm704
        %vm1439 = vmand %vm1438, %vm706
        %v1440 = vsel %vm1439, 1, 0
        %v1441 = vcvt.s32.f32 %v1440
        %v1443 = vlaneseq
        %v1444 = vshrl.u32 %v1443, 7
        %v1445 = vsub.s32 0, %v1444
        %v1446 = vrot.slane %v1441, %v1445
        %v1447 = vlaneseq
        %v1448 = vshrl.u32 %v1447, 7
        %v1449 = vsub.s32 1, %v1448
        %v1450 = vrot.slane %v1441, %v1449
        %v1453 = vmul.f32 %v1437, %v1446
        %v1454 = vmul.f32 %v1436, %v1450
        %v1455 = vadd.f32 %v1430, %v1453
        %v1456 = vadd.f32 %v1431, %v1454
        %1457 = vrot.lane.b32.xlu0 %v1263, 52
        %v1458 = vpop.permute.xlu0 %1457
        %1459 = vrot.lane.b32.xlu0 %v1264, 52
        %v1460 = vpop.permute.xlu0 %1459
        %v1461 = vsel %vm1324, %v1458, %v1460
        %v1462 = vsel %vm1324, %v1460, %v1458
        %vm1463 = vmand %vm1412, %vm1327
        %vm1464 = vmand %vm1463, %vm1329
        %v1465 = vsel %vm1464, 1, 0
        %v1466 = vcvt.s32.f32 %v1465
        %v1468 = vlaneseq
        %v1469 = vshrl.u32 %v1468, 7
        %v1470 = vsub.s32 0, %v1469
        %v1471 = vrot.slane %v1466, %v1470
        %v1472 = vlaneseq
        %v1473 = vshrl.u32 %v1472, 7
        %v1474 = vsub.s32 1, %v1473
        %v1475 = vrot.slane %v1466, %v1474
        %v1478 = vmul.f32 %v1462, %v1471
        %v1479 = vmul.f32 %v1461, %v1475
        %v1480 = vadd.f32 %v1455, %v1478
        %v1481 = vadd.f32 %v1456, %v1479
        %s1482 = scalar_lea.vmem %s278, 72
        %v1483 = vld [vmem:[%s1482] sm:$0xf]
        %v1484 = vld [vmem:[%s1482 + $0x4] sm:$0xf]
        %v1485 = vld [vmem:[%s1482 + $0x8] sm:$0xf]
        %v1486 = vld [vmem:[%s1482 + $0xc] sm:$0xf]
        %v1487 = vld [vmem:[%s1482 + $0x10] sm:$0xf]
        %v1488 = vld [vmem:[%s1482 + $0x14] sm:$0xf]
        %v1489 = vld [vmem:[%s1482 + $0x18] sm:$0xf]
        %v1490 = vld [vmem:[%s1482 + $0x1c] sm:$0xf]
        %v1491 = vld [vmem:[%s1482 + $0x20] sm:$0xf]
        %s1492 = scalar_lea.vmem %s282, 72
        %v1493 = vld [vmem:[%s1492] sm:$0xf]
        %v1494 = vld [vmem:[%s1492 + $0x4] sm:$0xf]
        %v1495 = vld [vmem:[%s1492 + $0x8] sm:$0xf]
        %v1496 = vld [vmem:[%s1492 + $0xc] sm:$0xf]
        %v1497 = vld [vmem:[%s1492 + $0x10] sm:$0xf]
        %v1498 = vld [vmem:[%s1492 + $0x14] sm:$0xf]
        %v1499 = vld [vmem:[%s1492 + $0x18] sm:$0xf]
        %v1500 = vld [vmem:[%s1492 + $0x1c] sm:$0xf]
        %v1501 = vld [vmem:[%s1492 + $0x20] sm:$0xf]
        %v1511 = vunpack.c.l.b16 %v1483
        %v1512 = vunpack.c.l.b16 %v1484
        %v1513 = vunpack.c.l.b16 %v1485
        %v1514 = vunpack.c.l.b16 %v1486
        %v1515 = vunpack.c.l.b16 %v1487
        %v1516 = vunpack.c.l.b16 %v1488
        %v1517 = vunpack.c.l.b16 %v1489
        %v1518 = vunpack.c.l.b16 %v1490
        %v1519 = vunpack.c.l.b16 %v1491
        %v1520 = vpack.c.b16 %v1512, %v1511
        %v1521 = vpack.c.b16 %v1514, %v1513
        %v1522 = vpack.c.b16 %v1516, %v1515
        %v1523 = vpack.c.b16 %v1518, %v1517
        %v1524 = vpack.c.b16 %v1519, %v1519
        %v1526 = vsel %vm338, %v1520, 0
        %v1529 = vsel %vm338, %v1521, 0
        %v1532 = vsel %vm338, %v1522, 0
        %v1535 = vsel %vm338, %v1523, 0
        %v1538 = vsel %vm338, %v1524, 0
        %1540 = vmatprep.subr.bf16.mxu0 %v359
        %1541 = vmatpush1.bf16.msra.mxu0 %v356
        %1542 = vmatprep.subr.bf16.mxu0 0
        %1543 = vmatpush1.bf16.msra.mxu0 0
        %1544 = vmatprep.subr.bf16.mxu0 0
        %1545 = vmatpush1.bf16.msra.mxu0 0
        %1546 = vmatprep.subr.bf16.mxu0 0
        %1547 = vmatpush1.bf16.msra.mxu0 0
        %1548 = vmatprep.subr.bf16.mxu0 0
        %1549 = vmatpush1.bf16.msra.mxu0 0
        %1550 = vmatprep.subr.bf16.mxu0 0
        %1551 = vmatpush1.bf16.msra.mxu0 0
        %1552 = vmatprep.subr.bf16.mxu0 0
        %1553 = vmatpush1.bf16.msra.mxu0 0
        %1554 = vmatprep.subr.bf16.mxu0 0
        %1555 = vmatpush1.bf16.msra.mxu0 0
        %1556 = vmatprep.subr.bf16.mxu0 0
        %1557 = vmatpush1.bf16.msra.mxu0 0
        %1558 = vmatprep.subr.bf16.mxu0 0
        %1559 = vmatpush1.bf16.msra.mxu0 0
        %1560 = vmatprep.subr.bf16.mxu0 0
        %1561 = vmatpush1.bf16.msra.mxu0 0
        %1562 = vmatprep.subr.bf16.mxu0 0
        %1563 = vmatpush1.bf16.msra.mxu0 0
        %1564 = vmatprep.subr.bf16.mxu0 0
        %1565 = vmatpush1.bf16.msra.mxu0 0
        %1566 = vmatprep.subr.bf16.mxu0 0
        %1567 = vmatpush1.bf16.msra.mxu0 0
        %1568 = vmatprep.subr.bf16.mxu0 0
        %1569 = vmatpush1.bf16.msra.mxu0 0
        %1570 = vmatprep.subr.bf16.mxu0 0
        %1571 = vmatpush1.bf16.msra.mxu0 0
        %1572 = vmatprep.mubr.bf16.mxu0 0
        %1573 = vmatmul.mubr.bf16.gmra.mrb[0].mxu0 %v1526
        %v1574 = vpop.f32.mrb[0].mxu0
        %v1575 = vpop.f32.mrb[0].mxu0
        %v1576 = vpop.f32.mrb[0].mxu0
        %v1577 = vpop.f32.mrb[0].mxu0
        %1578 = vmatprep.mubr.bf16.mxu0 0
        %1579 = vmatmul.mubr.bf16.gmra.mrb[0].mxu0 %v1529
        %v1580 = vpop.f32.mrb[0].mxu0
        %v1581 = vpop.f32.mrb[0].mxu0
        %v1582 = vpop.f32.mrb[0].mxu0
        %v1583 = vpop.f32.mrb[0].mxu0
        %1584 = vmatprep.mubr.bf16.mxu0 0
        %1585 = vmatmul.mubr.bf16.gmra.mrb[0].mxu0 %v1532
        %v1586 = vpop.f32.mrb[0].mxu0
        %v1587 = vadd.f32 0.0, %v1586
        %v1588 = vpop.f32.mrb[0].mxu0
        %v1589 = vadd.f32 0.0, %v1588
        %v1590 = vpop.f32.mrb[0].mxu0
        %v1591 = vpop.f32.mrb[0].mxu0
        %1592 = vmatprep.mubr.bf16.mxu0 0
        %1593 = vmatmul.mubr.bf16.gmra.mrb[0].mxu0 %v1535
        %v1594 = vpop.f32.mrb[0].mxu0
        %v1595 = vpop.f32.mrb[0].mxu0
        %v1596 = vpop.f32.mrb[0].mxu0
        %v1597 = vpop.f32.mrb[0].mxu0
        %1598 = vmatprep.mubr.bf16.mxu0 0
        %1599 = vmatmul.mubr.bf16.gmra.mrb[0].mxu0 %v1538
        %v1600 = vpop.f32.mrb[0].mxu0
        %v1601 = vpop.f32.mrb[0].mxu0
        %v1602 = vpop.f32.mrb[0].mxu0
        %v1603 = vpop.f32.mrb[0].mxu0
        %1604 = vdwg.mxu0
        %1605 = vmatprep.subr.bf16.mxu0 %v446
        %1606 = vmatpush1.bf16.msra.mxu0 %v443
        %1607 = vmatprep.subr.bf16.mxu0 0
        %1608 = vmatpush1.bf16.msra.mxu0 0
        %1609 = vmatprep.subr.bf16.mxu0 0
        %1610 = vmatpush1.bf16.msra.mxu0 0
        %1611 = vmatprep.subr.bf16.mxu0 0
        %1612 = vmatpush1.bf16.msra.mxu0 0
        %1613 = vmatprep.subr.bf16.mxu0 0
        %1614 = vmatpush1.bf16.msra.mxu0 0
        %1615 = vmatprep.subr.bf16.mxu0 0
        %1616 = vmatpush1.bf16.msra.mxu0 0
        %1617 = vmatprep.subr.bf16.mxu0 0
        %1618 = vmatpush1.bf16.msra.mxu0 0
        %1619 = vmatprep.subr.bf16.mxu0 0
        %1620 = vmatpush1.bf16.msra.mxu0 0
        %1621 = vmatprep.subr.bf16.mxu0 0
        %1622 = vmatpush1.bf16.msra.mxu0 0
        %1623 = vmatprep.subr.bf16.mxu0 0
        %1624 = vmatpush1.bf16.msra.mxu0 0
        %1625 = vmatprep.subr.bf16.mxu0 0
        %1626 = vmatpush1.bf16.msra.mxu0 0
        %1627 = vmatprep.subr.bf16.mxu0 0
        %1628 = vmatpush1.bf16.msra.mxu0 0
        %1629 = vmatprep.subr.bf16.mxu0 0
        %1630 = vmatpush1.bf16.msra.mxu0 0
        %1631 = vmatprep.subr.bf16.mxu0 0
        %1632 = vmatpush1.bf16.msra.mxu0 0
        %1633 = vmatprep.subr.bf16.mxu0 0
        %1634 = vmatpush1.bf16.msra.mxu0 0
        %1635 = vmatprep.subr.bf16.mxu0 0
        %1636 = vmatpush1.bf16.msra.mxu0 0
        %1637 = vmatprep.mubr.bf16.mxu0 0
        %1638 = vmatmul.mubr.bf16.gmra.mrb[0].mxu0 %v1526
        %v1639 = vpop.f32.mrb[0].mxu0
        %v1640 = vpop.f32.mrb[0].mxu0
        %v1641 = vpop.f32.mrb[0].mxu0
        %v1642 = vpop.f32.mrb[0].mxu0
        %1643 = vmatprep.mubr.bf16.mxu0 0
        %1644 = vmatmul.mubr.bf16.gmra.mrb[0].mxu0 %v1529
        %v1645 = vpop.f32.mrb[0].mxu0
        %v1646 = vpop.f32.mrb[0].mxu0
        %v1647 = vpop.f32.mrb[0].mxu0
        %v1648 = vpop.f32.mrb[0].mxu0
        %1649 = vmatprep.mubr.bf16.mxu0 0
        %1650 = vmatmul.mubr.bf16.gmra.mrb[0].mxu0 %v1532
        %v1651 = vpop.f32.mrb[0].mxu0
        %v1652 = vadd.f32 %v1587, %v1651
        %v1653 = vpop.f32.mrb[0].mxu0
        %v1654 = vadd.f32 %v1589, %v1653
        %v1655 = vpop.f32.mrb[0].mxu0
        %v1656 = vpop.f32.mrb[0].mxu0
        %1657 = vmatprep.mubr.bf16.mxu0 0
        %1658 = vmatmul.mubr.bf16.gmra.mrb[0].mxu0 %v1535
        %v1659 = vpop.f32.mrb[0].mxu0
        %v1660 = vpop.f32.mrb[0].mxu0
        %v1661 = vpop.f32.mrb[0].mxu0
        %v1662 = vpop.f32.mrb[0].mxu0
        %1663 = vmatprep.mubr.bf16.mxu0 0
        %1664 = vmatmul.mubr.bf16.gmra.mrb[0].mxu0 %v1538
        %v1665 = vpop.f32.mrb[0].mxu0
        %v1666 = vpop.f32.mrb[0].mxu0
        %v1667 = vpop.f32.mrb[0].mxu0
        %v1668 = vpop.f32.mrb[0].mxu0
        %1669 = vdwg.mxu0
        %v1679 = vunpack.c.l.b16 %v1493
        %v1680 = vunpack.c.l.b16 %v1494
        %v1681 = vunpack.c.l.b16 %v1495
        %v1682 = vunpack.c.l.b16 %v1496
        %v1683 = vunpack.c.l.b16 %v1497
        %v1684 = vunpack.c.l.b16 %v1498
        %v1685 = vunpack.c.l.b16 %v1499
        %v1686 = vunpack.c.l.b16 %v1500
        %v1687 = vunpack.c.l.b16 %v1501
        %v1688 = vpack.c.b16 %v1680, %v1679
        %v1689 = vpack.c.b16 %v1682, %v1681
        %v1690 = vpack.c.b16 %v1684, %v1683
        %v1691 = vpack.c.b16 %v1686, %v1685
        %v1692 = vpack.c.b16 %v1687, %v1687
        %v1694 = vsel %vm338, %v1688, 0
        %v1697 = vsel %vm338, %v1689, 0
        %v1700 = vsel %vm338, %v1690, 0
        %v1703 = vsel %vm338, %v1691, 0
        %v1706 = vsel %vm338, %v1692, 0
        %1708 = vmatprep.subr.bf16.mxu0 %v446
        %1709 = vmatpush1.bf16.msra.mxu0 %v443
        %1710 = vmatprep.subr.bf16.mxu0 0
        %1711 = vmatpush1.bf16.msra.mxu0 0
        %1712 = vmatprep.subr.bf16.mxu0 0
        %1713 = vmatpush1.bf16.msra.mxu0 0
        %1714 = vmatprep.subr.bf16.mxu0 0
        %1715 = vmatpush1.bf16.msra.mxu0 0
        %1716 = vmatprep.subr.bf16.mxu0 0
        %1717 = vmatpush1.bf16.msra.mxu0 0
        %1718 = vmatprep.subr.bf16.mxu0 0
        %1719 = vmatpush1.bf16.msra.mxu0 0
        %1720 = vmatprep.subr.bf16.mxu0 0
        %1721 = vmatpush1.bf16.msra.mxu0 0
        %1722 = vmatprep.subr.bf16.mxu0 0
        %1723 = vmatpush1.bf16.msra.mxu0 0
        %1724 = vmatprep.subr.bf16.mxu0 0
        %1725 = vmatpush1.bf16.msra.mxu0 0
        %1726 = vmatprep.subr.bf16.mxu0 0
        %1727 = vmatpush1.bf16.msra.mxu0 0
        %1728 = vmatprep.subr.bf16.mxu0 0
        %1729 = vmatpush1.bf16.msra.mxu0 0
        %1730 = vmatprep.subr.bf16.mxu0 0
        %1731 = vmatpush1.bf16.msra.mxu0 0
        %1732 = vmatprep.subr.bf16.mxu0 0
        %1733 = vmatpush1.bf16.msra.mxu0 0
        %1734 = vmatprep.subr.bf16.mxu0 0
        %1735 = vmatpush1.bf16.msra.mxu0 0
        %1736 = vmatprep.subr.bf16.mxu0 0
        %1737 = vmatpush1.bf16.msra.mxu0 0
        %1738 = vmatprep.subr.bf16.mxu0 0
        %1739 = vmatpush1.bf16.msra.mxu0 0
        %1740 = vmatprep.mubr.bf16.mxu0 0
        %1741 = vmatmul.mubr.bf16.gmra.mrb[0].mxu0 %v1694
        %v1742 = vpop.f32.mrb[0].mxu0
        %v1743 = vpop.f32.mrb[0].mxu0
        %v1744 = vpop.f32.mrb[0].mxu0
        %v1745 = vpop.f32.mrb[0].mxu0
        %1746 = vmatprep.mubr.bf16.mxu0 0
        %1747 = vmatmul.mubr.bf16.gmra.mrb[0].mxu0 %v1697
        %v1748 = vpop.f32.mrb[0].mxu0
        %v1749 = vpop.f32.mrb[0].mxu0
        %v1750 = vpop.f32.mrb[0].mxu0
        %v1751 = vpop.f32.mrb[0].mxu0
        %1752 = vmatprep.mubr.bf16.mxu0 0
        %1753 = vmatmul.mubr.bf16.gmra.mrb[0].mxu0 %v1700
        %v1754 = vpop.f32.mrb[0].mxu0
        %v1755 = vadd.f32 0.0, %v1754
        %v1756 = vpop.f32.mrb[0].mxu0
        %v1757 = vadd.f32 0.0, %v1756
        %v1758 = vpop.f32.mrb[0].mxu0
        %v1759 = vpop.f32.mrb[0].mxu0
        %1760 = vmatprep.mubr.bf16.mxu0 0
        %1761 = vmatmul.mubr.bf16.gmra.mrb[0].mxu0 %v1703
        %v1762 = vpop.f32.mrb[0].mxu0
        %v1763 = vpop.f32.mrb[0].mxu0
        %v1764 = vpop.f32.mrb[0].mxu0
        %v1765 = vpop.f32.mrb[0].mxu0
        %1766 = vmatprep.mubr.bf16.mxu0 0
        %1767 = vmatmul.mubr.bf16.gmra.mrb[0].mxu0 %v1706
        %v1768 = vpop.f32.mrb[0].mxu0
        %v1769 = vpop.f32.mrb[0].mxu0
        %v1770 = vpop.f32.mrb[0].mxu0
        %v1771 = vpop.f32.mrb[0].mxu0
        %1772 = vdwg.mxu0
        %v1773 = vadd.f32 %v1652, %v1755
        %v1774 = vadd.f32 %v1654, %v1757
        %v1775 = vmul.f32 %v1773, %v790
        %v1776 = vmul.f32 %v1774, %v794
        %s1777 = scalar_lea.vmem %s278, 108
        %v1778 = vld [vmem:[%s1777] sm:$0xf]
        %v1779 = vld [vmem:[%s1777 + $0x4] sm:$0xf]
        %v1780 = vld [vmem:[%s1777 + $0x8] sm:$0xf]
        %v1781 = vld [vmem:[%s1777 + $0xc] sm:$0xf]
        %v1782 = vld [vmem:[%s1777 + $0x10] sm:$0xf]
        %v1783 = vld [vmem:[%s1777 + $0x14] sm:$0xf]
        %v1784 = vld [vmem:[%s1777 + $0x18] sm:$0xf]
        %v1785 = vld [vmem:[%s1777 + $0x1c] sm:$0xf]
        %v1786 = vld [vmem:[%s1777 + $0x20] sm:$0xf]
        %s1787 = scalar_lea.vmem %s282, 108
        %v1788 = vld [vmem:[%s1787] sm:$0xf]
        %v1789 = vld [vmem:[%s1787 + $0x4] sm:$0xf]
        %v1790 = vld [vmem:[%s1787 + $0x8] sm:$0xf]
        %v1791 = vld [vmem:[%s1787 + $0xc] sm:$0xf]
        %v1792 = vld [vmem:[%s1787 + $0x10] sm:$0xf]
        %v1793 = vld [vmem:[%s1787 + $0x14] sm:$0xf]
        %v1794 = vld [vmem:[%s1787 + $0x18] sm:$0xf]
        %v1795 = vld [vmem:[%s1787 + $0x1c] sm:$0xf]
        %v1796 = vld [vmem:[%s1787 + $0x20] sm:$0xf]
        %v1806 = vunpack.c.l.b16 %v1778
        %v1807 = vunpack.c.l.b16 %v1779
        %v1808 = vunpack.c.l.b16 %v1780
        %v1809 = vunpack.c.l.b16 %v1781
        %v1810 = vunpack.c.l.b16 %v1782
        %v1811 = vunpack.c.l.b16 %v1783
        %v1812 = vunpack.c.l.b16 %v1784
        %v1813 = vunpack.c.l.b16 %v1785
        %v1814 = vunpack.c.l.b16 %v1786
        %v1815 = vpack.c.b16 %v1807, %v1806
        %v1816 = vpack.c.b16 %v1809, %v1808
        %v1817 = vpack.c.b16 %v1811, %v1810
        %v1818 = vpack.c.b16 %v1813, %v1812
        %v1819 = vpack.c.b16 %v1814, %v1814
        %v1821 = vsel %vm338, %v1815, 0
        %v1824 = vsel %vm338, %v1816, 0
        %v1827 = vsel %vm338, %v1817, 0
        %v1830 = vsel %vm338, %v1818, 0
        %v1833 = vsel %vm338, %v1819, 0
        %1835 = vmatprep.subr.bf16.mxu0 %v359
        %1836 = vmatpush1.bf16.msra.mxu0 %v356
        %1837 = vmatprep.subr.bf16.mxu0 0
        %1838 = vmatpush1.bf16.msra.mxu0 0
        %1839 = vmatprep.subr.bf16.mxu0 0
        %1840 = vmatpush1.bf16.msra.mxu0 0
        %1841 = vmatprep.subr.bf16.mxu0 0
        %1842 = vmatpush1.bf16.msra.mxu0 0
        %1843 = vmatprep.subr.bf16.mxu0 0
        %1844 = vmatpush1.bf16.msra.mxu0 0
        %1845 = vmatprep.subr.bf16.mxu0 0
        %1846 = vmatpush1.bf16.msra.mxu0 0
        %1847 = vmatprep.subr.bf16.mxu0 0
        %1848 = vmatpush1.bf16.msra.mxu0 0
        %1849 = vmatprep.subr.bf16.mxu0 0
        %1850 = vmatpush1.bf16.msra.mxu0 0
        %1851 = vmatprep.subr.bf16.mxu0 0
        %1852 = vmatpush1.bf16.msra.mxu0 0
        %1853 = vmatprep.subr.bf16.mxu0 0
        %1854 = vmatpush1.bf16.msra.mxu0 0
        %1855 = vmatprep.subr.bf16.mxu0 0
        %1856 = vmatpush1.bf16.msra.mxu0 0
        %1857 = vmatprep.subr.bf16.mxu0 0
        %1858 = vmatpush1.bf16.msra.mxu0 0
        %1859 = vmatprep.subr.bf16.mxu0 0
        %1860 = vmatpush1.bf16.msra.mxu0 0
        %1861 = vmatprep.subr.bf16.mxu0 0
        %1862 = vmatpush1.bf16.msra.mxu0 0
        %1863 = vmatprep.subr.bf16.mxu0 0
        %1864 = vmatpush1.bf16.msra.mxu0 0
        %1865 = vmatprep.subr.bf16.mxu0 0
        %1866 = vmatpush1.bf16.msra.mxu0 0
        %1867 = vmatprep.mubr.bf16.mxu0 0
        %1868 = vmatmul.mubr.bf16.gmra.mrb[0].mxu0 %v1821
        %v1869 = vpop.f32.mrb[0].mxu0
        %v1870 = vpop.f32.mrb[0].mxu0
        %v1871 = vpop.f32.mrb[0].mxu0
        %v1872 = vpop.f32.mrb[0].mxu0
        %1873 = vmatprep.mubr.bf16.mxu0 0
        %1874 = vmatmul.mubr.bf16.gmra.mrb[0].mxu0 %v1824
        %v1875 = vpop.f32.mrb[0].mxu0
        %v1876 = vpop.f32.mrb[0].mxu0
        %v1877 = vpop.f32.mrb[0].mxu0
        %v1878 = vpop.f32.mrb[0].mxu0
        %1879 = vmatprep.mubr.bf16.mxu0 0
        %1880 = vmatmul.mubr.bf16.gmra.mrb[0].mxu0 %v1827
        %v1881 = vpop.f32.mrb[0].mxu0
        %v1882 = vadd.f32 0.0, %v1881
        %v1883 = vpop.f32.mrb[0].mxu0
        %v1884 = vadd.f32 0.0, %v1883
        %v1885 = vpop.f32.mrb[0].mxu0
        %v1886 = vpop.f32.mrb[0].mxu0
        %1887 = vmatprep.mubr.bf16.mxu0 0
        %1888 = vmatmul.mubr.bf16.gmra.mrb[0].mxu0 %v1830
        %v1889 = vpop.f32.mrb[0].mxu0
        %v1890 = vpop.f32.mrb[0].mxu0
        %v1891 = vpop.f32.mrb[0].mxu0
        %v1892 = vpop.f32.mrb[0].mxu0
        %1893 = vmatprep.mubr.bf16.mxu0 0
        %1894 = vmatmul.mubr.bf16.gmra.mrb[0].mxu0 %v1833
        %v1895 = vpop.f32.mrb[0].mxu0
        %v1896 = vpop.f32.mrb[0].mxu0
        %v1897 = vpop.f32.mrb[0].mxu0
        %v1898 = vpop.f32.mrb[0].mxu0
        %1899 = vdwg.mxu0
        %1900 = vmatprep.subr.bf16.mxu0 %v446
        %1901 = vmatpush1.bf16.msra.mxu0 %v443
        %1902 = vmatprep.subr.bf16.mxu0 0
        %1903 = vmatpush1.bf16.msra.mxu0 0
        %1904 = vmatprep.subr.bf16.mxu0 0
        %1905 = vmatpush1.bf16.msra.mxu0 0
        %1906 = vmatprep.subr.bf16.mxu0 0
        %1907 = vmatpush1.bf16.msra.mxu0 0
        %1908 = vmatprep.subr.bf16.mxu0 0
        %1909 = vmatpush1.bf16.msra.mxu0 0
        %1910 = vmatprep.subr.bf16.mxu0 0
        %1911 = vmatpush1.bf16.msra.mxu0 0
        %1912 = vmatprep.subr.bf16.mxu0 0
        %1913 = vmatpush1.bf16.msra.mxu0 0
        %1914 = vmatprep.subr.bf16.mxu0 0
        %1915 = vmatpush1.bf16.msra.mxu0 0
        %1916 = vmatprep.subr.bf16.mxu0 0
        %1917 = vmatpush1.bf16.msra.mxu0 0
        %1918 = vmatprep.subr.bf16.mxu0 0
        %1919 = vmatpush1.bf16.msra.mxu0 0
        %1920 = vmatprep.subr.bf16.mxu0 0
        %1921 = vmatpush1.bf16.msra.mxu0 0
        %1922 = vmatprep.subr.bf16.mxu0 0
        %1923 = vmatpush1.bf16.msra.mxu0 0
        %1924 = vmatprep.subr.bf16.mxu0 0
        %1925 = vmatpush1.bf16.msra.mxu0 0
        %1926 = vmatprep.subr.bf16.mxu0 0
        %1927 = vmatpush1.bf16.msra.mxu0 0
        %1928 = vmatprep.subr.bf16.mxu0 0
        %1929 = vmatpush1.bf16.msra.mxu0 0
        %1930 = vmatprep.subr.bf16.mxu0 0
        %1931 = vmatpush1.bf16.msra.mxu0 0
        %1932 = vmatprep.mubr.bf16.mxu0 0
        %1933 = vmatmul.mubr.bf16.gmra.mrb[0].mxu0 %v1821
        %v1934 = vpop.f32.mrb[0].mxu0
        %v1935 = vpop.f32.mrb[0].mxu0
        %v1936 = vpop.f32.mrb[0].mxu0
        %v1937 = vpop.f32.mrb[0].mxu0
        %1938 = vmatprep.mubr.bf16.mxu0 0
        %1939 = vmatmul.mubr.bf16.gmra.mrb[0].mxu0 %v1824
        %v1940 = vpop.f32.mrb[0].mxu0
        %v1941 = vpop.f32.mrb[0].mxu0
        %v1942 = vpop.f32.mrb[0].mxu0
        %v1943 = vpop.f32.mrb[0].mxu0
        %1944 = vmatprep.mubr.bf16.mxu0 0
        %1945 = vmatmul.mubr.bf16.gmra.mrb[0].mxu0 %v1827
        %v1946 = vpop.f32.mrb[0].mxu0
        %v1947 = vadd.f32 %v1882, %v1946
        %v1948 = vpop.f32.mrb[0].mxu0
        %v1949 = vadd.f32 %v1884, %v1948
        %v1950 = vpop.f32.mrb[0].mxu0
        %v1951 = vpop.f32.mrb[0].mxu0
        %1952 = vmatprep.mubr.bf16.mxu0 0
        %1953 = vmatmul.mubr.bf16.gmra.mrb[0].mxu0 %v1830
        %v1954 = vpop.f32.mrb[0].mxu0
        %v1955 = vpop.f32.mrb[0].mxu0
        %v1956 = vpop.f32.mrb[0].mxu0
        %v1957 = vpop.f32.mrb[0].mxu0
        %1958 = vmatprep.mubr.bf16.mxu0 0
        %1959 = vmatmul.mubr.bf16.gmra.mrb[0].mxu0 %v1833
        %v1960 = vpop.f32.mrb[0].mxu0
        %v1961 = vpop.f32.mrb[0].mxu0
        %v1962 = vpop.f32.mrb[0].mxu0
        %v1963 = vpop.f32.mrb[0].mxu0
        %1964 = vdwg.mxu0
        %v1974 = vunpack.c.l.b16 %v1788
        %v1975 = vunpack.c.l.b16 %v1789
        %v1976 = vunpack.c.l.b16 %v1790
        %v1977 = vunpack.c.l.b16 %v1791
        %v1978 = vunpack.c.l.b16 %v1792
        %v1979 = vunpack.c.l.b16 %v1793
        %v1980 = vunpack.c.l.b16 %v1794
        %v1981 = vunpack.c.l.b16 %v1795
        %v1982 = vunpack.c.l.b16 %v1796
        %v1983 = vpack.c.b16 %v1975, %v1974
        %v1984 = vpack.c.b16 %v1977, %v1976
        %v1985 = vpack.c.b16 %v1979, %v1978
        %v1986 = vpack.c.b16 %v1981, %v1980
        %v1987 = vpack.c.b16 %v1982, %v1982
        %v1989 = vsel %vm338, %v1983, 0
        %v1992 = vsel %vm338, %v1984, 0
        %v1995 = vsel %vm338, %v1985, 0
        %v1998 = vsel %vm338, %v1986, 0
        %v2001 = vsel %vm338, %v1987, 0
        %2003 = vmatprep.subr.bf16.mxu0 %v446
        %2004 = vmatpush1.bf16.msra.mxu0 %v443
        %2005 = vmatprep.subr.bf16.mxu0 0
        %2006 = vmatpush1.bf16.msra.mxu0 0
        %2007 = vmatprep.subr.bf16.mxu0 0
        %2008 = vmatpush1.bf16.msra.mxu0 0
        %2009 = vmatprep.subr.bf16.mxu0 0
        %2010 = vmatpush1.bf16.msra.mxu0 0
        %2011 = vmatprep.subr.bf16.mxu0 0
        %2012 = vmatpush1.bf16.msra.mxu0 0
        %2013 = vmatprep.subr.bf16.mxu0 0
        %2014 = vmatpush1.bf16.msra.mxu0 0
        %2015 = vmatprep.subr.bf16.mxu0 0
        %2016 = vmatpush1.bf16.msra.mxu0 0
        %2017 = vmatprep.subr.bf16.mxu0 0
        %2018 = vmatpush1.bf16.msra.mxu0 0
        %2019 = vmatprep.subr.bf16.mxu0 0
        %2020 = vmatpush1.bf16.msra.mxu0 0
        %2021 = vmatprep.subr.bf16.mxu0 0
        %2022 = vmatpush1.bf16.msra.mxu0 0
        %2023 = vmatprep.subr.bf16.mxu0 0
        %2024 = vmatpush1.bf16.msra.mxu0 0
        %2025 = vmatprep.subr.bf16.mxu0 0
        %2026 = vmatpush1.bf16.msra.mxu0 0
        %2027 = vmatprep.subr.bf16.mxu0 0
        %2028 = vmatpush1.bf16.msra.mxu0 0
        %2029 = vmatprep.subr.bf16.mxu0 0
        %2030 = vmatpush1.bf16.msra.mxu0 0
        %2031 = vmatprep.subr.bf16.mxu0 0
        %2032 = vmatpush1.bf16.msra.mxu0 0
        %2033 = vmatprep.subr.bf16.mxu0 0
        %2034 = vmatpush1.bf16.msra.mxu0 0
        %2035 = vmatprep.mubr.bf16.mxu0 0
        %2036 = vmatmul.mubr.bf16.gmra.mrb[0].mxu0 %v1989
        %v2037 = vpop.f32.mrb[0].mxu0
        %v2038 = vpop.f32.mrb[0].mxu0
        %v2039 = vpop.f32.mrb[0].mxu0
        %v2040 = vpop.f32.mrb[0].mxu0
        %2041 = vmatprep.mubr.bf16.mxu0 0
        %2042 = vmatmul.mubr.bf16.gmra.mrb[0].mxu0 %v1992
        %v2043 = vpop.f32.mrb[0].mxu0
        %v2044 = vpop.f32.mrb[0].mxu0
        %v2045 = vpop.f32.mrb[0].mxu0
        %v2046 = vpop.f32.mrb[0].mxu0
        %2047 = vmatprep.mubr.bf16.mxu0 0
        %2048 = vmatmul.mubr.bf16.gmra.mrb[0].mxu0 %v1995
        %v2049 = vpop.f32.mrb[0].mxu0
        %v2050 = vadd.f32 0.0, %v2049
        %v2051 = vpop.f32.mrb[0].mxu0
        %v2052 = vadd.f32 0.0, %v2051
        %v2053 = vpop.f32.mrb[0].mxu0
        %v2054 = vpop.f32.mrb[0].mxu0
        %2055 = vmatprep.mubr.bf16.mxu0 0
        %2056 = vmatmul.mubr.bf16.gmra.mrb[0].mxu0 %v1998
        %v2057 = vpop.f32.mrb[0].mxu0
        %v2058 = vpop.f32.mrb[0].mxu0
        %v2059 = vpop.f32.mrb[0].mxu0
        %v2060 = vpop.f32.mrb[0].mxu0
        %2061 = vmatprep.mubr.bf16.mxu0 0
        %2062 = vmatmul.mubr.bf16.gmra.mrb[0].mxu0 %v2001
        %v2063 = vpop.f32.mrb[0].mxu0
        %v2064 = vpop.f32.mrb[0].mxu0
        %v2065 = vpop.f32.mrb[0].mxu0
        %v2066 = vpop.f32.mrb[0].mxu0
        %2067 = vdwg.mxu0
        %v2068 = vadd.f32 %v1947, %v2050
        %v2069 = vadd.f32 %v1949, %v2052
        %v2070 = vmul.f32 %v2068, %v790
        %v2071 = vmul.f32 %v2069, %v794
        %v2072 = vadd.f32 %v906, %v1480
        %v2073 = vadd.f32 %v907, %v1481
        %v2074 = vadd.f32 %v1775, %v2070
        %v2075 = vadd.f32 %v1776, %v2071
        %v2076 = vadd.f32 %v2072, %v2074
        %v2077 = vadd.f32 %v2073, %v2075
        %p2078 = scmp.eq.s32.totalorder %s24, 0
        // Predicated region
        $region41: #{tpu_custom_call.1} parent=39 // pred_check
          %p2079 = pneg %p2078
        $region42: #{tpu_custom_call.1} parent=39 // pred_check_branch
          %2081 = sbr.rel (%p2079) target = $region44
        $region43: #{tpu_custom_call.1} parent=39 // pred_region
          %v2082 = vld [vmem:[%s4] sm:$0xff]
          %2084 = vset.pattern.permute.xlu0 0
          %2085 = vperm.xlu0 %2084, %v2082
          %v2086 = vpop.permute.xlu0 %2085
          %v2088 = vadd.f32 %v2076, %v2086
          %v2089 = vadd.f32 %v2077, %v2086
          %2090 = vst [vmem:[%s265] sm:$0xff] %v2088
          %2091 = vst [vmem:[%s265 + $0x8] sm:$0xff] %v2089
        $region44: #{tpu_custom_call.1} parent=39 // pred_fallthru
          _
        %p2092 = scmp.gt.s32.totalorder %s24, 0
        // Predicated region
        $region45: #{tpu_custom_call.1} parent=39 // pred_check
          %p2093 = pneg %p2092
        $region46: #{tpu_custom_call.1} parent=39 // pred_check_branch
          %2095 = sbr.rel (%p2093) target = $region48
        $region47: #{tpu_custom_call.1} parent=39 // pred_region
          %v2096 = vld [vmem:[%s265] sm:$0xff]
          %v2097 = vld [vmem:[%s265 + $0x8] sm:$0xff]
          %v2098 = vadd.f32 %v2096, %v2076
          %v2099 = vadd.f32 %v2097, %v2077
          %2100 = vst [vmem:[%s265] sm:$0xff] %v2098
          %2101 = vst [vmem:[%s265 + $0x8] sm:$0xff] %v2099
        $region48: #{tpu_custom_call.1} parent=39 // pred_fallthru
          _
        %s2102 = sand.u32 %s161, 1
        %s2103 = scalar_lea.sflag [#allocation3], %s2102
        %s2104 = sand.u32 %s161, 1
        %s2105 = smul.addr %s2104, 16
        %s2106 = scalar_lea.vmem [#allocation2], %s2105
        // Predicated region
        $region49: #{tpu_custom_call.1} parent=39 // pred_check
          %p2107 = pneg %p171
        $region50: #{tpu_custom_call.1} parent=39 // pred_check_branch
          %2109 = sbr.rel (%p2107) target = $region52
        $region51: #{tpu_custom_call.1} parent=39 // pred_region
          %s2111 = ssub.s32 256, 256
          %2112 = vsyncadd %s2103, %s2111
          %s2113 = smul.addr %s23, 2
          %s2114 = smul.addr %s2113, 128
          %s2115 = scalar_lea.hbm %s5, %s2114
          %s2117 = sshll.u32 %s2106, 4
          %s2118 = int_to_ptr.vmem [resolvable:$true] %s2117
          %2120 = dma.vmem_to_hbm [thread:$0]  %s2118, 256, %s2115, %s2103
        $region52: #{tpu_custom_call.1} parent=39 // pred_fallthru
          _
      $region40: #{tpu_custom_call.1} parent=5 // pred_fallthru
        _
      %p2121 = scmp.le.s32.totalorder 2, %s14
      // Predicated region
      $region53: #{tpu_custom_call.1} parent=5 // pred_check
        %p2122 = pneg %p2121
      $region54: #{tpu_custom_call.1} parent=5 // pred_check_branch
        %2124 = sbr.rel (%p2122) target = $region56
      $region55: #{tpu_custom_call.1} parent=5 // pred_region
        %s2125 = ssub.s32 %s14, 2
        // Predicated region
        $region57: #{tpu_custom_call.1} parent=55 // pred_check
          %p2126 = pneg %p177
        $region58: #{tpu_custom_call.1} parent=55 // pred_check_branch
          %2128 = sbr.rel (%p2126) target = $region60
        $region59: #{tpu_custom_call.1} parent=55 // pred_region
          %s2129 = sand.u32 %s162, 1
          %s2130 = scalar_lea.sflag [#allocation3], %s2129
          %s2131 = sand.u32 %s162, 1
          %s2132 = smul.addr %s2131, 16
          %s2133 = scalar_lea.vmem [#allocation2], %s2132
          %2134 = dma.done %s2130, 256
        $region60: #{tpu_custom_call.1} parent=55 // pred_fallthru
          _
      $region56: #{tpu_custom_call.1} parent=5 // pred_fallthru
        _
    $region6: #{tpu_custom_call.1} parent=1 // loop_footer
      %s18 = sadd.s32 1, %s14
    $region7: #{tpu_custom_call.1} parent=1 // loop_footer_branch
      %13 = sbr.rel target = $region3
    $region8: #{tpu_custom_call.1} parent=1 // loop_exit
      _
    %2135 = vsyncpa [#allocation3], 1
    %s2136 = scalar_lea.sflag [#allocation3], 1
    %2137 = vsyncpa %s2136, 1

</llo_original>
